<compile_context>
chip_gen: v5e
topology: v5e:2x2
jax: 0.10.0
libtpu: 0.0.40
codegen_flags: <defaults>
</compile_context>

<pallas_src>
import jax
import jax.numpy as jnp
from jax import lax
from jax.experimental import pallas as pl
from jax.experimental.pallas import tpu as pltpu


def _make_cin_kernel(field_size, emb_dim, layer_size, split_half, batch_tile,
                     use_activation, mxu_dtype):
    n_layers = len(layer_size)
    tn = batch_tile * emb_dim  # lanes-resident rows per grid step (b-major, d-minor)

    def kernel(x_ref, *args):
        w_refs = args[:n_layers]             # each (F, H_i, size_i), pre-transposed
        b_refs = args[n_layers:2 * n_layers]  # each (1, size_i)
        o_ref = args[2 * n_layers]            # (batch_tile, featuremap_num)

        x0 = x_ref[...]                       # (TN, F) float32
        hidden = x0                           # x^{k-1}; H_0 = F feature maps

        # Block-diagonal 0/1 matrix: sum_map[t, n] = 1  iff  n // D == t.
        row = lax.broadcasted_iota(jnp.int32, (batch_tile, tn), 0)
        col = lax.broadcasted_iota(jnp.int32, (batch_tile, tn), 1)
        lo = row * emb_dim
        sum_map = ((col >= lo) & (col < lo + emb_dim)).astype(jnp.float32)

        off = 0
        for i, size in enumerate(layer_size):
            w_ref = w_refs[i]
            bias = b_refs[i][...]             # (1, size) -> sublane broadcast
            acc = jnp.zeros((tn, size), jnp.float32)
            for m in range(field_size):       # small static loop over fields
                lhs = hidden.astype(mxu_dtype)
                q = jnp.dot(lhs, w_ref[m], preferred_element_type=jnp.float32)
                acc = acc + x0[:, m:m + 1] * q   # lane broadcast of x0 column m
            cur = acc + bias
            if use_activation:
                cur = jnp.maximum(cur, 0.0)   # F.relu (module default)

            if split_half and i != n_layers - 1:
                hidden = cur[:, : size // 2]  # next_hidden = first half
                direct = cur[:, size // 2:]   # direct_connect = second half
                d_size = size // 2
            else:
                hidden = cur
                direct = cur
                d_size = size

            # Per-example sum over the embedding dim, done on the MXU: (TB, d_size).
            part = jnp.dot(sum_map, direct, preferred_element_type=jnp.float32)
            o_ref[:, off:off + d_size] = part.astype(o_ref.dtype)
            off += d_size

    return kernel


def cin_forward(x, conv_weights, conv_biases, *, layer_size=(128, 128),
                split_half=True, use_activation=True, batch_tile=None,
                mxu_dtype=jnp.float32):
    """CIN forward.

    x: (B, F, D) float32.
    conv_weights[i]: (size_i, H_i * F)  (PyTorch Conv1d weight with kernel dim squeezed).
    conv_biases[i]:  (size_i,).
    Returns (B, featuremap_num), matching the PyTorch module.
    """
    B, F, D = x.shape
    n_layers = len(layer_size)

    if batch_tile is None:
        batch_tile = B
    assert B % batch_tile == 0, "batch must be divisible by batch_tile"
    assert batch_tile == B or batch_tile % 8 == 0, \
        "batch_tile must be a multiple of 8 (sublane tiling) or equal to B"

    # Lane-friendly activation layout: rows n = b*D + d, cols = field.
    x_nm = jnp.transpose(x, (0, 2, 1)).reshape(B * D, F).astype(jnp.float32)

    # Pre-arrange conv weights (S, H*F) -> (F, H, S): no in-kernel transpose needed.
    field_nums = [F]
    w_ops, b_ops, direct_sizes = [], [], []
    for i, size in enumerate(layer_size):
        H = field_nums[-1]
        W = jnp.asarray(conv_weights[i]).reshape(size, H, F)
        w_ops.append(jnp.transpose(W, (2, 1, 0)).astype(mxu_dtype))      # (F, H, S)
        b_ops.append(jnp.asarray(conv_biases[i]).reshape(1, size).astype(jnp.float32))
        if split_half and i != n_layers - 1:
            direct_sizes.append(size // 2)
            field_nums.append(size // 2)
        else:
            direct_sizes.append(size)
            field_nums.append(size)
    featuremap_num = sum(direct_sizes)

    tn = batch_tile * D
    grid = (B // batch_tile,)

    in_specs = [pl.BlockSpec((tn, F), lambda i: (i, 0))]
    for w in w_ops:
        in_specs.append(pl.BlockSpec(w.shape, lambda i: (0, 0, 0)))      # resident
    for b in b_ops:
        in_specs.append(pl.BlockSpec(b.shape, lambda i: (0, 0)))         # resident
    out_specs = pl.BlockSpec((batch_tile, featuremap_num), lambda i: (i, 0))

    kernel = _make_cin_kernel(F, D, tuple(layer_size), split_half, batch_tile,
                              use_activation, mxu_dtype)

    out = pl.pallas_call(
        kernel,
        out_shape=jax.ShapeDtypeStruct((B, featuremap_num), jnp.float32),
        grid=grid,
        in_specs=in_specs,
        out_specs=out_specs,
        compiler_params=pltpu.CompilerParams(
            dimension_semantics=("parallel",),
            vmem_limit_bytes=32 * 1024 * 1024),
    )(x_nm, *w_ops, *b_ops)

    return out


def cin_forward_ref(x, conv_weights, conv_biases, *, layer_size=(128, 128),
                    split_half=True, use_activation=True):
    """Pure-JAX reference mirroring the PyTorch forward."""
    B, F, D = x.shape
    n_layers = len(layer_size)
    hidden = [x]
    finals = []
    for i, size in enumerate(layer_size):
        z = jnp.einsum('bhd,bmd->bhmd', hidden[-1], hidden[0])
        z = z.reshape(B, hidden[-1].shape[1] * F, D)
        out = jnp.einsum('sc,bcd->bsd', conv_weights[i], z) + conv_biases[i][None, :, None]
        if use_activation:
            out = jax.nn.relu(out)
        if split_half and i != n_layers - 1:
            nh, dc = out[:, : size // 2], out[:, size // 2:]
        else:
            nh, dc = out, out
        finals.append(dc)
        hidden.append(nh)
    res = jnp.concatenate(finals, axis=1)
    return jnp.sum(res, axis=-1)


if __name__ == "__main__":
    batch = 16
    field_size = 4
    embedding_size = 32
    layer_size = (128, 128)      # module defaults
    split_half = True

    key = jax.random.PRNGKey(0)
    kx, *kws = jax.random.split(key, 1 + 2 * len(layer_size))

    x = jax.random.normal(kx, (batch, field_size, embedding_size), dtype=jnp.float32)

    # nn.Conv1d(C, S, 1) default init: uniform(-1/sqrt(C), 1/sqrt(C)) for weight and bias.
    conv_weights, conv_biases = [], []
    field_nums = [field_size]
    for i, size in enumerate(layer_size):
        C = field_nums[-1] * field_size
        bound = 1.0 / (C ** 0.5)
        conv_weights.append(jax.random.uniform(
            kws[2 * i], (size, C), minval=-bound, maxval=bound, dtype=jnp.float32))
        conv_biases.append(jax.random.uniform(
            kws[2 * i + 1], (size,), minval=-bound, maxval=bound, dtype=jnp.float32))
        field_nums.append(size // 2 if (split_half and i != len(layer_size) - 1) else size)

    out = cin_forward(x, conv_weights, conv_biases, layer_size=layer_size,
                      split_half=split_half, batch_tile=8)
    out = jax.block_until_ready(out)

    ref = cin_forward_ref(x, conv_weights, conv_biases, layer_size=layer_size,
                          split_half=split_half)

    featuremap_num = (sum(layer_size[:-1]) // 2 + layer_size[-1]) if split_half else sum(layer_size)
    assert out.shape == (batch, featuremap_num), out.shape
    max_err = float(jnp.max(jnp.abs(out - ref)))
    assert jnp.allclose(out, ref, rtol=1e-3, atol=1e-3), f"mismatch vs reference: {max_err}"

    print("KERNEL_OK")
</pallas_src>

<mosaic_0001>
module attributes {stable_mosaic.version = 11 : i64} {
  func.func @kernel(%arg0: i32, %arg1: memref<256x4xf32, #tpu.memory_space<vmem>>, %arg2: memref<4x4x128xf32, #tpu.memory_space<vmem>>, %arg3: memref<4x64x128xf32, #tpu.memory_space<vmem>>, %arg4: memref<1x128xf32, #tpu.memory_space<vmem>>, %arg5: memref<1x128xf32, #tpu.memory_space<vmem>>, %arg6: memref<8x192xf32, #tpu.memory_space<vmem>>) attributes {dimension_semantics = [#tpu.dimension_semantics<parallel>], iteration_bounds = array<i64: 2>, scalar_prefetch = 0 : i64, scratch_operands = 0 : i64, tpu.core_type = #tpu.core_type<tc>, window_params = [{transform_indices = @transform_0, window_bounds = array<i64: 256, 4>}, {pipeline_mode = #tpu.pipeline_mode<synchronous>, transform_indices = @transform_1, window_bounds = array<i64: 4, 4, 128>}, {pipeline_mode = #tpu.pipeline_mode<synchronous>, transform_indices = @transform_2, window_bounds = array<i64: 4, 64, 128>}, {pipeline_mode = #tpu.pipeline_mode<synchronous>, transform_indices = @transform_3, window_bounds = array<i64: 1, 128>}, {pipeline_mode = #tpu.pipeline_mode<synchronous>, transform_indices = @transform_4, window_bounds = array<i64: 1, 128>}, {transform_indices = @transform_5, window_bounds = array<i64: 8, 192>}]} {
    %c0 = arith.constant 0 : index
    %c0_0 = arith.constant 0 : index
    %0 = vector.load %arg1[%c0, %c0_0] : memref<256x4xf32, #tpu.memory_space<vmem>>, vector<256x4xf32>
    %1 = tpu.iota {dimensions = array<i32: 0>} : vector<8x256xi32>
    %2 = tpu.iota {dimensions = array<i32: 1>} : vector<8x256xi32>
    %c32_i32 = arith.constant 32 : i32
    %3 = vector.broadcast %c32_i32 : i32 to vector<8x256xi32>
    %4 = arith.muli %1, %3 : vector<8x256xi32>
    %5 = arith.cmpi sge, %2, %4 : vector<8x256xi32>
    %c32_i32_1 = arith.constant 32 : i32
    %6 = vector.broadcast %c32_i32_1 : i32 to vector<8x256xi32>
    %7 = arith.addi %4, %6 : vector<8x256xi32>
    %8 = arith.cmpi slt, %2, %7 : vector<8x256xi32>
    %9 = arith.andi %5, %8 : vector<8x256xi1>
    %10 = arith.extui %9 : vector<8x256xi1> to vector<8x256xi32>
    %11 = arith.sitofp %10 : vector<8x256xi32> to vector<8x256xf32>
    %c0_2 = arith.constant 0 : index
    %c0_3 = arith.constant 0 : index
    %12 = vector.load %arg4[%c0_2, %c0_3] : memref<1x128xf32, #tpu.memory_space<vmem>>, vector<1x128xf32>
    %cst = arith.constant 0.000000e+00 : f32
    %13 = vector.broadcast %cst : f32 to vector<256x128xf32>
    %c0_4 = arith.constant 0 : index
    %c0_5 = arith.constant 0 : index
    %c0_6 = arith.constant 0 : index
    %14 = vector.load %arg2[%c0_4, %c0_5, %c0_6] : memref<4x4x128xf32, #tpu.memory_space<vmem>>, vector<1x4x128xf32>
    %15 = vector.shape_cast %14 : vector<1x4x128xf32> to vector<4x128xf32>
    %cst_7 = arith.constant dense<0.000000e+00> : vector<256x128xf32>
    %16 = tpu.matmul %0, %15, %cst_7 {dimension_numbers = #tpu.dot_dimension_numbers<[1], [0], [0], [1], [0, 0, 1, 1], [], []>} : vector<256x4xf32>, vector<4x128xf32>, vector<256x128xf32> -> vector<256x128xf32>
    %17 = vector.extract_strided_slice %0 {offsets = [0, 0], sizes = [256, 1], strides = [1, 1]} : vector<256x4xf32> to vector<256x1xf32>
    %18 = vector.broadcast %17 : vector<256x1xf32> to vector<256x128xf32>
    %19 = arith.mulf %18, %16 : vector<256x128xf32>
    %20 = arith.addf %13, %19 : vector<256x128xf32>
    %c1 = arith.constant 1 : index
    %c0_8 = arith.constant 0 : index
    %c0_9 = arith.constant 0 : index
    %21 = vector.load %arg2[%c1, %c0_8, %c0_9] : memref<4x4x128xf32, #tpu.memory_space<vmem>>, vector<1x4x128xf32>
    %22 = vector.shape_cast %21 : vector<1x4x128xf32> to vector<4x128xf32>
    %cst_10 = arith.constant dense<0.000000e+00> : vector<256x128xf32>
    %23 = tpu.matmul %0, %22, %cst_10 {dimension_numbers = #tpu.dot_dimension_numbers<[1], [0], [0], [1], [0, 0, 1, 1], [], []>} : vector<256x4xf32>, vector<4x128xf32>, vector<256x128xf32> -> vector<256x128xf32>
    %24 = vector.extract_strided_slice %0 {offsets = [0, 1], sizes = [256, 1], strides = [1, 1]} : vector<256x4xf32> to vector<256x1xf32>
    %25 = vector.broadcast %24 : vector<256x1xf32> to vector<256x128xf32>
    %26 = arith.mulf %25, %23 : vector<256x128xf32>
    %27 = arith.addf %20, %26 : vector<256x128xf32>
    %c2 = arith.constant 2 : index
    %c0_11 = arith.constant 0 : index
    %c0_12 = arith.constant 0 : index
    %28 = vector.load %arg2[%c2, %c0_11, %c0_12] : memref<4x4x128xf32, #tpu.memory_space<vmem>>, vector<1x4x128xf32>
    %29 = vector.shape_cast %28 : vector<1x4x128xf32> to vector<4x128xf32>
    %cst_13 = arith.constant dense<0.000000e+00> : vector<256x128xf32>
    %30 = tpu.matmul %0, %29, %cst_13 {dimension_numbers = #tpu.dot_dimension_numbers<[1], [0], [0], [1], [0, 0, 1, 1], [], []>} : vector<256x4xf32>, vector<4x128xf32>, vector<256x128xf32> -> vector<256x128xf32>
    %31 = vector.extract_strided_slice %0 {offsets = [0, 2], sizes = [256, 1], strides = [1, 1]} : vector<256x4xf32> to vector<256x1xf32>
    %32 = vector.broadcast %31 : vector<256x1xf32> to vector<256x128xf32>
    %33 = arith.mulf %32, %30 : vector<256x128xf32>
    %34 = arith.addf %27, %33 : vector<256x128xf32>
    %c3 = arith.constant 3 : index
    %c0_14 = arith.constant 0 : index
    %c0_15 = arith.constant 0 : index
    %35 = vector.load %arg2[%c3, %c0_14, %c0_15] : memref<4x4x128xf32, #tpu.memory_space<vmem>>, vector<1x4x128xf32>
    %36 = vector.shape_cast %35 : vector<1x4x128xf32> to vector<4x128xf32>
    %cst_16 = arith.constant dense<0.000000e+00> : vector<256x128xf32>
    %37 = tpu.matmul %0, %36, %cst_16 {dimension_numbers = #tpu.dot_dimension_numbers<[1], [0], [0], [1], [0, 0, 1, 1], [], []>} : vector<256x4xf32>, vector<4x128xf32>, vector<256x128xf32> -> vector<256x128xf32>
    %38 = vector.extract_strided_slice %0 {offsets = [0, 3], sizes = [256, 1], strides = [1, 1]} : vector<256x4xf32> to vector<256x1xf32>
    %39 = vector.broadcast %38 : vector<256x1xf32> to vector<256x128xf32>
    %40 = arith.mulf %39, %37 : vector<256x128xf32>
    %41 = arith.addf %34, %40 : vector<256x128xf32>
    %42 = vector.broadcast %12 : vector<1x128xf32> to vector<256x128xf32>
    %43 = arith.addf %41, %42 : vector<256x128xf32>
    %cst_17 = arith.constant 0.000000e+00 : f32
    %44 = vector.broadcast %cst_17 : f32 to vector<256x128xf32>
    %45 = arith.maximumf %43, %44 : vector<256x128xf32>
    %46 = vector.extract_strided_slice %45 {offsets = [0, 0], sizes = [256, 64], strides = [1, 1]} : vector<256x128xf32> to vector<256x64xf32>
    %47 = vector.extract_strided_slice %45 {offsets = [0, 64], sizes = [256, 64], strides = [1, 1]} : vector<256x128xf32> to vector<256x64xf32>
    %cst_18 = arith.constant dense<0.000000e+00> : vector<8x64xf32>
    %48 = tpu.matmul %11, %47, %cst_18 {dimension_numbers = #tpu.dot_dimension_numbers<[1], [0], [0], [1], [0, 0, 1, 1], [], []>} : vector<8x256xf32>, vector<256x64xf32>, vector<8x64xf32> -> vector<8x64xf32>
    %c0_19 = arith.constant 0 : index
    %c0_20 = arith.constant 0 : index
    %49 = vector.load %arg6[%c0_19, %c0_20] : memref<8x192xf32, #tpu.memory_space<vmem>>, vector<8x64xf32>
    tpu.vector_store %arg6[%c0_19, %c0_20], %48 {strides = array<i32>} : memref<8x192xf32, #tpu.memory_space<vmem>>, vector<8x64xf32>,
    %c0_21 = arith.constant 0 : index
    %c0_22 = arith.constant 0 : index
    %50 = vector.load %arg5[%c0_21, %c0_22] : memref<1x128xf32, #tpu.memory_space<vmem>>, vector<1x128xf32>
    %cst_23 = arith.constant 0.000000e+00 : f32
    %51 = vector.broadcast %cst_23 : f32 to vector<256x128xf32>
    %c0_24 = arith.constant 0 : index
    %c0_25 = arith.constant 0 : index
    %c0_26 = arith.constant 0 : index
    %52 = vector.load %arg3[%c0_24, %c0_25, %c0_26] : memref<4x64x128xf32, #tpu.memory_space<vmem>>, vector<1x64x128xf32>
    %53 = vector.shape_cast %52 : vector<1x64x128xf32> to vector<64x128xf32>
    %cst_27 = arith.constant dense<0.000000e+00> : vector<256x128xf32>
    %54 = tpu.matmul %46, %53, %cst_27 {dimension_numbers = #tpu.dot_dimension_numbers<[1], [0], [0], [1], [0, 0, 1, 1], [], []>} : vector<256x64xf32>, vector<64x128xf32>, vector<256x128xf32> -> vector<256x128xf32>
    %55 = vector.extract_strided_slice %0 {offsets = [0, 0], sizes = [256, 1], strides = [1, 1]} : vector<256x4xf32> to vector<256x1xf32>
    %56 = vector.broadcast %55 : vector<256x1xf32> to vector<256x128xf32>
    %57 = arith.mulf %56, %54 : vector<256x128xf32>
    %58 = arith.addf %51, %57 : vector<256x128xf32>
    %c1_28 = arith.constant 1 : index
    %c0_29 = arith.constant 0 : index
    %c0_30 = arith.constant 0 : index
    %59 = vector.load %arg3[%c1_28, %c0_29, %c0_30] : memref<4x64x128xf32, #tpu.memory_space<vmem>>, vector<1x64x128xf32>
    %60 = vector.shape_cast %59 : vector<1x64x128xf32> to vector<64x128xf32>
    %cst_31 = arith.constant dense<0.000000e+00> : vector<256x128xf32>
    %61 = tpu.matmul %46, %60, %cst_31 {dimension_numbers = #tpu.dot_dimension_numbers<[1], [0], [0], [1], [0, 0, 1, 1], [], []>} : vector<256x64xf32>, vector<64x128xf32>, vector<256x128xf32> -> vector<256x128xf32>
    %62 = vector.extract_strided_slice %0 {offsets = [0, 1], sizes = [256, 1], strides = [1, 1]} : vector<256x4xf32> to vector<256x1xf32>
    %63 = vector.broadcast %62 : vector<256x1xf32> to vector<256x128xf32>
    %64 = arith.mulf %63, %61 : vector<256x128xf32>
    %65 = arith.addf %58, %64 : vector<256x128xf32>
    %c2_32 = arith.constant 2 : index
    %c0_33 = arith.constant 0 : index
    %c0_34 = arith.constant 0 : index
    %66 = vector.load %arg3[%c2_32, %c0_33, %c0_34] : memref<4x64x128xf32, #tpu.memory_space<vmem>>, vector<1x64x128xf32>
    %67 = vector.shape_cast %66 : vector<1x64x128xf32> to vector<64x128xf32>
    %cst_35 = arith.constant dense<0.000000e+00> : vector<256x128xf32>
    %68 = tpu.matmul %46, %67, %cst_35 {dimension_numbers = #tpu.dot_dimension_numbers<[1], [0], [0], [1], [0, 0, 1, 1], [], []>} : vector<256x64xf32>, vector<64x128xf32>, vector<256x128xf32> -> vector<256x128xf32>
    %69 = vector.extract_strided_slice %0 {offsets = [0, 2], sizes = [256, 1], strides = [1, 1]} : vector<256x4xf32> to vector<256x1xf32>
    %70 = vector.broadcast %69 : vector<256x1xf32> to vector<256x128xf32>
    %71 = arith.mulf %70, %68 : vector<256x128xf32>
    %72 = arith.addf %65, %71 : vector<256x128xf32>
    %c3_36 = arith.constant 3 : index
    %c0_37 = arith.constant 0 : index
    %c0_38 = arith.constant 0 : index
    %73 = vector.load %arg3[%c3_36, %c0_37, %c0_38] : memref<4x64x128xf32, #tpu.memory_space<vmem>>, vector<1x64x128xf32>
    %74 = vector.shape_cast %73 : vector<1x64x128xf32> to vector<64x128xf32>
    %cst_39 = arith.constant dense<0.000000e+00> : vector<256x128xf32>
    %75 = tpu.matmul %46, %74, %cst_39 {dimension_numbers = #tpu.dot_dimension_numbers<[1], [0], [0], [1], [0, 0, 1, 1], [], []>} : vector<256x64xf32>, vector<64x128xf32>, vector<256x128xf32> -> vector<256x128xf32>
    %76 = vector.extract_strided_slice %0 {offsets = [0, 3], sizes = [256, 1], strides = [1, 1]} : vector<256x4xf32> to vector<256x1xf32>
    %77 = vector.broadcast %76 : vector<256x1xf32> to vector<256x128xf32>
    %78 = arith.mulf %77, %75 : vector<256x128xf32>
    %79 = arith.addf %72, %78 : vector<256x128xf32>
    %80 = vector.broadcast %50 : vector<1x128xf32> to vector<256x128xf32>
    %81 = arith.addf %79, %80 : vector<256x128xf32>
    %cst_40 = arith.constant 0.000000e+00 : f32
    %82 = vector.broadcast %cst_40 : f32 to vector<256x128xf32>
    %83 = arith.maximumf %81, %82 : vector<256x128xf32>
    %cst_41 = arith.constant dense<0.000000e+00> : vector<8x128xf32>
    %84 = tpu.matmul %11, %83, %cst_41 {dimension_numbers = #tpu.dot_dimension_numbers<[1], [0], [0], [1], [0, 0, 1, 1], [], []>} : vector<8x256xf32>, vector<256x128xf32>, vector<8x128xf32> -> vector<8x128xf32>
    %c0_42 = arith.constant 0 : index
    %c64 = arith.constant 64 : index
    %85 = vector.load %arg6[%c0_42, %c64] : memref<8x192xf32, #tpu.memory_space<vmem>>, vector<8x128xf32>
    tpu.vector_store %arg6[%c0_42, %c64], %84 {strides = array<i32>} : memref<8x192xf32, #tpu.memory_space<vmem>>, vector<8x128xf32>,
    return
  }
  func.func @transform_0(%arg0: i32) -> (i32, i32) {
    %c0_i32 = arith.constant 0 : i32
    %c0_i32_0 = arith.constant 0 : i32
    return %arg0, %c0_i32 : i32, i32
  }
  func.func @transform_1(%arg0: i32) -> (i32, i32, i32) {
    %c0_i32 = arith.constant 0 : i32
    %c0_i32_0 = arith.constant 0 : i32
    %c0_i32_1 = arith.constant 0 : i32
    %c0_i32_2 = arith.constant 0 : i32
    return %c0_i32, %c0_i32_0, %c0_i32_1 : i32, i32, i32
  }
  func.func @transform_2(%arg0: i32) -> (i32, i32, i32) {
    %c0_i32 = arith.constant 0 : i32
    %c0_i32_0 = arith.constant 0 : i32
    %c0_i32_1 = arith.constant 0 : i32
    %c0_i32_2 = arith.constant 0 : i32
    return %c0_i32, %c0_i32_0, %c0_i32_1 : i32, i32, i32
  }
  func.func @transform_3(%arg0: i32) -> (i32, i32) {
    %c0_i32 = arith.constant 0 : i32
    %c0_i32_0 = arith.constant 0 : i32
    %c0_i32_1 = arith.constant 0 : i32
    return %c0_i32, %c0_i32_0 : i32, i32
  }
  func.func @transform_4(%arg0: i32) -> (i32, i32) {
    %c0_i32 = arith.constant 0 : i32
    %c0_i32_0 = arith.constant 0 : i32
    %c0_i32_1 = arith.constant 0 : i32
    return %c0_i32, %c0_i32_0 : i32, i32
  }
  func.func @transform_5(%arg0: i32) -> (i32, i32) {
    %c0_i32 = arith.constant 0 : i32
    %c0_i32_0 = arith.constant 0 : i32
    return %arg0, %c0_i32 : i32, i32
  }
}

</mosaic_0001>

<llo_original>
// kernel: tpu_custom_call.1
$region0: #{tpu_custom_call.1}
  #allocation0 [shape = 'u32[]', space=smem, size = 0x4, offset = 0x4, fixed_abs, tag = 'smem constant byte address 0x4 - core index']
  #allocation1 [shape = 'u32[72,128]{1,0:T(1,128)}', space=vmem, size = 0x9000, scoped, tag = 'internal scratch']
  %s0 = inlined_call_operand.vmem [shape: f32[512,4], index: 0, kind: input, shape index: {}]
  %s1 = inlined_call_operand.vmem [shape: f32[4,4,128], index: 1, kind: input, shape index: {}]
  %s2 = inlined_call_operand.vmem [shape: f32[4,64,128], index: 2, kind: input, shape index: {}]
  %s3 = inlined_call_operand.vmem [shape: f32[1,128], index: 3, kind: input, shape index: {}]
  %s4 = inlined_call_operand.vmem [shape: f32[1,128], index: 4, kind: input, shape index: {}]
  %s5 = inlined_call_operand.hbm [shape: f32[16,192], index: 5, kind: output, shape index: {}]
  %s6 = sld [smem:[#allocation0]]
  $region53: #{tpu_custom_call.1} parent=0
    _
  %s8 = ssub.s32 1, %s6
  %s9 = scalar_select 0, %s8, %s6
  $region1: #{tpu_custom_call.1} parent=0
    #allocation2 [shape = 'u8[16384]{0}', space=vmem, size = 0x4000, scoped, tag = 'output window, operand 0']
    #allocation3 [shape = 's32[2]{0}', space=sflag, size = 0x8, scoped, tag = 'scoped memory for tpu_custom_call.1']
    %10 = vsyncpa [#allocation3], 0
    %s11 = scalar_lea.sflag [#allocation3], 1
    %12 = vsyncpa %s11, 0
    loop: start=0, step=1, limit=4
    $region2: #{tpu_custom_call.1} parent=1 // loop_pre_header
      _
    $region3: #{tpu_custom_call.1} parent=1 // loop_header
      %s14 = sphi 0, %s18
      %p15 = scmp.ge.s32.totalorder %s14, 4
      %s24 = sphi 0, %s26
      %s27 = sphi 0, %s24
      %s28 = sphi 0, %s27
      %s44 = sphi 0, %s28
      %s48 = sphi 0, %s48
      %s50 = sphi 0, %s48
      %s51 = sphi 0, %s50
      %s65 = sphi 0, %s51
      %s69 = sphi 0, %s69
      %s71 = sphi 0, %s69
      %s72 = sphi 0, %s71
      %s86 = sphi 0, %s72
      %s90 = sphi 0, %s90
      %s92 = sphi 0, %s90
      %s93 = sphi 0, %s92
      %s107 = sphi 0, %s93
      %s111 = sphi 0, %s111
      %s113 = sphi 0, %s111
      %s114 = sphi 0, %s113
      %s128 = sphi 0, %s114
      %s134 = sphi 0, %s136
      %s137 = sphi 0, %s134
      %s138 = sphi 0, %s137
      %s154 = sphi 0, %s138
    $region4: #{tpu_custom_call.1} parent=1 // loop_header_branch
      %17 = sbr.rel (%p15) target = $region8
    $region5: #{tpu_custom_call.1} parent=1 // loop_body
      %s19 = ssub.s32 %s14, 1
      %s20 = ssub.s32 %s14, 2
      %s21 = sadd.s32 %s14, 1
      %s22 = ssub.s32 %s14, %s21
      %p23 = scmp.eq.s32.totalorder %s22, 0
      %s25 = sadd.s32 %s24, 1
      %s26 = scalar_select %p23, %s24, %s25
      %p29 = pneg %p23
      %p30 = scmp.eq.s32.totalorder %s14, 1
      %p31 = por %p29, %p30
      %p32 = scmp.ne.s32.totalorder %s24, %s27
      %p33 = scmp.eq.s32.totalorder %s14, 0
      %p34 = por %p32, %p33
      %p35 = scmp.ne.s32.totalorder %s24, %s27
      %p36 = scmp.eq.s32.totalorder %s19, 1
      %p37 = por %p35, %p36
      %p38 = scmp.ne.s32.totalorder %s27, %s28
      %p39 = scmp.eq.s32.totalorder %s19, 0
      %p40 = por %p38, %p39
      %p41 = scmp.ne.s32.totalorder %s27, %s28
      %p42 = scmp.eq.s32.totalorder %s20, 1
      %p43 = por %p41, %p42
      %p45 = scmp.ne.s32.totalorder %s28, %s44
      %p46 = scmp.eq.s32.totalorder %s20, 0
      %p47 = por %p45, %p46
      %s49 = sadd.s32 %s48, 1
      %p52 = scmp.eq.s32.totalorder %s14, 1
      %p53 = scmp.ne.s32.totalorder %s48, %s50
      %p54 = scmp.eq.s32.totalorder %s14, 0
      %p55 = por %p53, %p54
      %p56 = scmp.ne.s32.totalorder %s48, %s50
      %p57 = scmp.eq.s32.totalorder %s19, 1
      %p58 = por %p56, %p57
      %p59 = scmp.ne.s32.totalorder %s50, %s51
      %p60 = scmp.eq.s32.totalorder %s19, 0
      %p61 = por %p59, %p60
      %p62 = scmp.ne.s32.totalorder %s50, %s51
      %p63 = scmp.eq.s32.totalorder %s20, 1
      %p64 = por %p62, %p63
      %p66 = scmp.ne.s32.totalorder %s51, %s65
      %p67 = scmp.eq.s32.totalorder %s20, 0
      %p68 = por %p66, %p67
      %s70 = sadd.s32 %s69, 1
      %p73 = scmp.eq.s32.totalorder %s14, 1
      %p74 = scmp.ne.s32.totalorder %s69, %s71
      %p75 = scmp.eq.s32.totalorder %s14, 0
      %p76 = por %p74, %p75
      %p77 = scmp.ne.s32.totalorder %s69, %s71
      %p78 = scmp.eq.s32.totalorder %s19, 1
      %p79 = por %p77, %p78
      %p80 = scmp.ne.s32.totalorder %s71, %s72
      %p81 = scmp.eq.s32.totalorder %s19, 0
      %p82 = por %p80, %p81
      %p83 = scmp.ne.s32.totalorder %s71, %s72
      %p84 = scmp.eq.s32.totalorder %s20, 1
      %p85 = por %p83, %p84
      %p87 = scmp.ne.s32.totalorder %s72, %s86
      %p88 = scmp.eq.s32.totalorder %s20, 0
      %p89 = por %p87, %p88
      %s91 = sadd.s32 %s90, 1
      %p94 = scmp.eq.s32.totalorder %s14, 1
      %p95 = scmp.ne.s32.totalorder %s90, %s92
      %p96 = scmp.eq.s32.totalorder %s14, 0
      %p97 = por %p95, %p96
      %p98 = scmp.ne.s32.totalorder %s90, %s92
      %p99 = scmp.eq.s32.totalorder %s19, 1
      %p100 = por %p98, %p99
      %p101 = scmp.ne.s32.totalorder %s92, %s93
      %p102 = scmp.eq.s32.totalorder %s19, 0
      %p103 = por %p101, %p102
      %p104 = scmp.ne.s32.totalorder %s92, %s93
      %p105 = scmp.eq.s32.totalorder %s20, 1
      %p106 = por %p104, %p105
      %p108 = scmp.ne.s32.totalorder %s93, %s107
      %p109 = scmp.eq.s32.totalorder %s20, 0
      %p110 = por %p108, %p109
      %s112 = sadd.s32 %s111, 1
      %p115 = scmp.eq.s32.totalorder %s14, 1
      %p116 = scmp.ne.s32.totalorder %s111, %s113
      %p117 = scmp.eq.s32.totalorder %s14, 0
      %p118 = por %p116, %p117
      %p119 = scmp.ne.s32.totalorder %s111, %s113
      %p120 = scmp.eq.s32.totalorder %s19, 1
      %p121 = por %p119, %p120
      %p122 = scmp.ne.s32.totalorder %s113, %s114
      %p123 = scmp.eq.s32.totalorder %s19, 0
      %p124 = por %p122, %p123
      %p125 = scmp.ne.s32.totalorder %s113, %s114
      %p126 = scmp.eq.s32.totalorder %s20, 1
      %p127 = por %p125, %p126
      %p129 = scmp.ne.s32.totalorder %s114, %s128
      %p130 = scmp.eq.s32.totalorder %s20, 0
      %p131 = por %p129, %p130
      %s132 = ssub.s32 %s14, %s21
      %p133 = scmp.eq.s32.totalorder %s132, 0
      %s135 = sadd.s32 %s134, 1
      %s136 = scalar_select %p133, %s134, %s135
      %p139 = pneg %p133
      %p140 = scmp.eq.s32.totalorder %s14, 1
      %p141 = por %p139, %p140
      %p142 = scmp.ne.s32.totalorder %s134, %s137
      %p143 = scmp.eq.s32.totalorder %s14, 0
      %p144 = por %p142, %p143
      %p145 = scmp.ne.s32.totalorder %s134, %s137
      %p146 = scmp.eq.s32.totalorder %s19, 1
      %p147 = por %p145, %p146
      %p148 = scmp.ne.s32.totalorder %s137, %s138
      %p149 = scmp.eq.s32.totalorder %s19, 0
      %p150 = por %p148, %p149
      %p151 = scmp.ne.s32.totalorder %s137, %s138
      %p152 = scmp.eq.s32.totalorder %s20, 1
      %p153 = por %p151, %p152
      %p155 = scmp.ne.s32.totalorder %s138, %s154
      %p156 = scmp.eq.s32.totalorder %s20, 0
      %p157 = por %p155, %p156
      %p158 = scmp.le.s32.totalorder 1, %s14
      %p159 = scmp.lt.s32.totalorder %s14, 3
      %p160 = pnand %p158, %p159
      %p161 = pneg %p160
      // Predicated region
      $region9: #{tpu_custom_call.1} parent=5 // pred_check
        _
      $region10: #{tpu_custom_call.1} parent=5 // pred_check_branch
        %163 = sbr.rel (%p160) target = $region12
      $region11: #{tpu_custom_call.1} parent=5 // pred_region
        %s164 = ssub.s32 %s14, 1
        // Predicated region
        $region13: #{tpu_custom_call.1} parent=11 // pred_check
          %p165 = pneg %p61
        $region14: #{tpu_custom_call.1} parent=11 // pred_check_branch
          %167 = sbr.rel (%p165) target = $region16
        $region15: #{tpu_custom_call.1} parent=11 // pred_region
          _
        $region16: #{tpu_custom_call.1} parent=11 // pred_fallthru
          _
        // Predicated region
        $region17: #{tpu_custom_call.1} parent=11 // pred_check
          %p168 = pneg %p82
        $region18: #{tpu_custom_call.1} parent=11 // pred_check_branch
          %170 = sbr.rel (%p168) target = $region20
        $region19: #{tpu_custom_call.1} parent=11 // pred_region
          _
        $region20: #{tpu_custom_call.1} parent=11 // pred_fallthru
          _
        // Predicated region
        $region21: #{tpu_custom_call.1} parent=11 // pred_check
          %p171 = pneg %p103
        $region22: #{tpu_custom_call.1} parent=11 // pred_check_branch
          %173 = sbr.rel (%p171) target = $region24
        $region23: #{tpu_custom_call.1} parent=11 // pred_region
          _
        $region24: #{tpu_custom_call.1} parent=11 // pred_fallthru
          _
        // Predicated region
        $region25: #{tpu_custom_call.1} parent=11 // pred_check
          %p174 = pneg %p124
        $region26: #{tpu_custom_call.1} parent=11 // pred_check_branch
          %176 = sbr.rel (%p174) target = $region28
        $region27: #{tpu_custom_call.1} parent=11 // pred_region
          _
        $region28: #{tpu_custom_call.1} parent=11 // pred_fallthru
          _
      $region12: #{tpu_custom_call.1} parent=5 // pred_fallthru
        _
      %p177 = scmp.lt.s32.totalorder %s14, 2
      // Predicated region
      $region29: #{tpu_custom_call.1} parent=5 // pred_check
        %p178 = pneg %p177
      $region30: #{tpu_custom_call.1} parent=5 // pred_check_branch
        %180 = sbr.rel (%p178) target = $region32
      $region31: #{tpu_custom_call.1} parent=5 // pred_region
        // Predicated region
        $region33: #{tpu_custom_call.1} parent=31 // pred_check
          %p181 = pneg %p34
        $region34: #{tpu_custom_call.1} parent=31 // pred_check_branch
          %183 = sbr.rel (%p181) target = $region36
        $region35: #{tpu_custom_call.1} parent=31 // pred_region
          %s184 = smul.u32 32, %s14
          %p185 = scmp.lt.s32.totalorder %s184, 63
          %s186 = scalar_select %p185, %s184, 63
          %s187 = smul.addr %s186, 8
          %s188 = scalar_lea.vmem %s0, %s187
          %s189 = smul.u32 32, %s14
        $region36: #{tpu_custom_call.1} parent=31 // pred_fallthru
          _
      $region32: #{tpu_custom_call.1} parent=5 // pred_fallthru
        _
      %p190 = scmp.le.s32.totalorder 1, %s14
      %p191 = scmp.lt.s32.totalorder %s14, 3
      %p192 = pnand %p190, %p191
      %p193 = pneg %p192
      // Predicated region
      $region37: #{tpu_custom_call.1} parent=5 // pred_check
        _
      $region38: #{tpu_custom_call.1} parent=5 // pred_check_branch
        %195 = sbr.rel (%p192) target = $region40
      $region39: #{tpu_custom_call.1} parent=5 // pred_region
        %s196 = ssub.s32 %s14, 1
        %s197 = smul.u32 32, %s19
        %p198 = scmp.lt.s32.totalorder %s197, 63
        %s199 = scalar_select %p198, %s197, 63
        %s200 = smul.addr %s199, 8
        %s201 = scalar_lea.vmem %s0, %s200
        %p202 = pneg %p40
        %p203 = pneg %p37
        %p204 = pneg %p61
        %p205 = pneg %p58
        %p206 = pneg %p82
        %p207 = pneg %p79
        %p208 = pneg %p103
        %p209 = pneg %p100
        %p210 = pneg %p124
        %p211 = pneg %p121
        %p212 = pneg %p150
        %p213 = pneg %p147
        %s214 = sand.u32 %s137, 1
        %s215 = scalar_lea.sflag [#allocation3], %s214
        %s216 = sand.u32 %s137, 1
        %s217 = smul.addr %s216, 16
        %s218 = scalar_lea.vmem [#allocation2], %s217
        %s219 = smul.u32 32, %s19
        %p220 = scmp.lt.s32.totalorder %s219, 63
        %s221 = scalar_select %p220, %s219, 63
        %s222 = smul.addr %s221, 8
        %s223 = scalar_lea.vmem %s0, %s222
        %s224 = smul.u32 32, %s19
        %v225 = vld [vmem:[%s223] sm:$0xff]
        %v226 = vld [vmem:[%s223 + $0x8] sm:$0xff]
        %v227 = vld [vmem:[%s223 + $0x10] sm:$0xff]
        %v228 = vld [vmem:[%s223 + $0x18] sm:$0xff]
        %v229 = vld [vmem:[%s223 + $0x20] sm:$0xff]
        %v230 = vld [vmem:[%s223 + $0x28] sm:$0xff]
        %v231 = vld [vmem:[%s223 + $0x30] sm:$0xff]
        %v232 = vld [vmem:[%s223 + $0x38] sm:$0xff]
        %v233 = vld [vmem:[%s223 + $0x40] sm:$0xff]
        %v234 = vld [vmem:[%s223 + $0x48] sm:$0xff]
        %v235 = vld [vmem:[%s223 + $0x50] sm:$0xff]
        %v236 = vld [vmem:[%s223 + $0x58] sm:$0xff]
        %v237 = vld [vmem:[%s223 + $0x60] sm:$0xff]
        %v238 = vld [vmem:[%s223 + $0x68] sm:$0xff]
        %v239 = vld [vmem:[%s223 + $0x70] sm:$0xff]
        %v240 = vld [vmem:[%s223 + $0x78] sm:$0xff]
        %v241 = vld [vmem:[%s223 + $0x80] sm:$0xff]
        %v242 = vld [vmem:[%s223 + $0x88] sm:$0xff]
        %v243 = vld [vmem:[%s223 + $0x90] sm:$0xff]
        %v244 = vld [vmem:[%s223 + $0x98] sm:$0xff]
        %v245 = vld [vmem:[%s223 + $0xa0] sm:$0xff]
        %v246 = vld [vmem:[%s223 + $0xa8] sm:$0xff]
        %v247 = vld [vmem:[%s223 + $0xb0] sm:$0xff]
        %v248 = vld [vmem:[%s223 + $0xb8] sm:$0xff]
        %v249 = vld [vmem:[%s223 + $0xc0] sm:$0xff]
        %v250 = vld [vmem:[%s223 + $0xc8] sm:$0xff]
        %v251 = vld [vmem:[%s223 + $0xd0] sm:$0xff]
        %v252 = vld [vmem:[%s223 + $0xd8] sm:$0xff]
        %v253 = vld [vmem:[%s223 + $0xe0] sm:$0xff]
        %v254 = vld [vmem:[%s223 + $0xe8] sm:$0xff]
        %v255 = vld [vmem:[%s223 + $0xf0] sm:$0xff]
        %v256 = vld [vmem:[%s223 + $0xf8] sm:$0xff]
        %v257 = vlaneseq
        %v258 = vshrl.u32 %v257, 7
        %v259 = vlaneseq
        %v260 = vand.u32 %v259, 127
        %v261 = vadd.s32 %v260, 128
        %v262 = vmul.u32 %v258, 32
        %vm263 = vcmp.ge.s32.totalorder %v260, %v262
        %vm264 = vcmp.ge.s32.totalorder %v261, %v262
        %v265 = vadd.s32 %v262, 32
        %vm266 = vcmp.lt.s32.totalorder %v260, %v265
        %vm267 = vcmp.lt.s32.totalorder %v261, %v265
        %vm268 = vmand %vm263, %vm266
        %vm269 = vmand %vm264, %vm267
        %v270 = vsel %vm268, 1, 0
        %v271 = vsel %vm269, 1, 0
        %v272 = vcvt.s32.f32 %v270
        %v273 = vcvt.s32.f32 %v271
        %v274 = vld [vmem:[%s3] sm:$0x1]
        %v275 = vld [vmem:[%s1] sm:$0xf]
        %vm276 = vcmask 31744
        %v278 = vsel %vm276, %v225, 0
        %v281 = vsel %vm276, %v226, 0
        %v284 = vsel %vm276, %v227, 0
        %v287 = vsel %vm276, %v228, 0
        %v290 = vsel %vm276, %v229, 0
        %v293 = vsel %vm276, %v230, 0
        %v296 = vsel %vm276, %v231, 0
        %v299 = vsel %vm276, %v232, 0
        %v302 = vsel %vm276, %v233, 0
        %v305 = vsel %vm276, %v234, 0
        %v308 = vsel %vm276, %v235, 0
        %v311 = vsel %vm276, %v236, 0
        %v314 = vsel %vm276, %v237, 0
        %v317 = vsel %vm276, %v238, 0
        %v320 = vsel %vm276, %v239, 0
        %v323 = vsel %vm276, %v240, 0
        %v326 = vsel %vm276, %v241, 0
        %v329 = vsel %vm276, %v242, 0
        %v332 = vsel %vm276, %v243, 0
        %v335 = vsel %vm276, %v244, 0
        %v338 = vsel %vm276, %v245, 0
        %v341 = vsel %vm276, %v246, 0
        %v344 = vsel %vm276, %v247, 0
        %v347 = vsel %vm276, %v248, 0
        %v350 = vsel %vm276, %v249, 0
        %v353 = vsel %vm276, %v250, 0
        %v356 = vsel %vm276, %v251, 0
        %v359 = vsel %vm276, %v252, 0
        %v362 = vsel %vm276, %v253, 0
        %v365 = vsel %vm276, %v254, 0
        %v368 = vsel %vm276, %v255, 0
        %v371 = vsel %vm276, %v256, 0
        %vm373 = vcmask 1043456
        %v375 = vsel %vm373, %v275, 0
        %377 = vmatpush.msra.mxu0 0.0
        %378 = vmatpush.msra.mxu0 0.0
        %379 = vmatpush.msra.mxu0 0.0
        %380 = vmatpush.msra.mxu0 0.0
        %381 = vmatpush.msra.mxu0 0.0
        %382 = vmatpush.msra.mxu0 0.0
        %383 = vmatpush.msra.mxu0 0.0
        %384 = vmatpush.msra.mxu0 0.0
        %385 = vmatpush.msra.mxu0 0.0
        %386 = vmatpush.msra.mxu0 0.0
        %387 = vmatpush.msra.mxu0 0.0
        %388 = vmatpush.msra.mxu0 0.0
        %389 = vmatpush.msra.mxu0 0.0
        %390 = vmatpush.msra.mxu0 0.0
        %391 = vmatpush.msra.mxu0 0.0
        %392 = vmatpush.msra.mxu0 %v375
        %393 = vmatmul.f32.gmra.mxu0 %v278
        %v394 = vpop.f32.mrf.mxu0
        %v395 = vadd.f32 0.0, %v394
        %396 = vmatmul.f32.gmra.mxu0 %v281
        %v397 = vpop.f32.mrf.mxu0
        %v398 = vadd.f32 0.0, %v397
        %399 = vmatmul.f32.gmra.mxu0 %v284
        %v400 = vpop.f32.mrf.mxu0
        %v401 = vadd.f32 0.0, %v400
        %402 = vmatmul.f32.gmra.mxu0 %v287
        %v403 = vpop.f32.mrf.mxu0
        %v404 = vadd.f32 0.0, %v403
        %405 = vmatmul.f32.gmra.mxu0 %v290
        %v406 = vpop.f32.mrf.mxu0
        %v407 = vadd.f32 0.0, %v406
        %408 = vmatmul.f32.gmra.mxu0 %v293
        %v409 = vpop.f32.mrf.mxu0
        %v410 = vadd.f32 0.0, %v409
        %411 = vmatmul.f32.gmra.mxu0 %v296
        %v412 = vpop.f32.mrf.mxu0
        %v413 = vadd.f32 0.0, %v412
        %414 = vmatmul.f32.gmra.mxu0 %v299
        %v415 = vpop.f32.mrf.mxu0
        %v416 = vadd.f32 0.0, %v415
        %417 = vmatmul.f32.gmra.mxu0 %v302
        %v418 = vpop.f32.mrf.mxu0
        %v419 = vadd.f32 0.0, %v418
        %420 = vmatmul.f32.gmra.mxu0 %v305
        %v421 = vpop.f32.mrf.mxu0
        %v422 = vadd.f32 0.0, %v421
        %423 = vmatmul.f32.gmra.mxu0 %v308
        %v424 = vpop.f32.mrf.mxu0
        %v425 = vadd.f32 0.0, %v424
        %426 = vmatmul.f32.gmra.mxu0 %v311
        %v427 = vpop.f32.mrf.mxu0
        %v428 = vadd.f32 0.0, %v427
        %429 = vmatmul.f32.gmra.mxu0 %v314
        %v430 = vpop.f32.mrf.mxu0
        %v431 = vadd.f32 0.0, %v430
        %432 = vmatmul.f32.gmra.mxu0 %v317
        %v433 = vpop.f32.mrf.mxu0
        %v434 = vadd.f32 0.0, %v433
        %435 = vmatmul.f32.gmra.mxu0 %v320
        %v436 = vpop.f32.mrf.mxu0
        %v437 = vadd.f32 0.0, %v436
        %438 = vmatmul.f32.gmra.mxu0 %v323
        %v439 = vpop.f32.mrf.mxu0
        %v440 = vadd.f32 0.0, %v439
        %441 = vmatmul.f32.gmra.mxu0 %v326
        %v442 = vpop.f32.mrf.mxu0
        %v443 = vadd.f32 0.0, %v442
        %444 = vmatmul.f32.gmra.mxu0 %v329
        %v445 = vpop.f32.mrf.mxu0
        %v446 = vadd.f32 0.0, %v445
        %447 = vmatmul.f32.gmra.mxu0 %v332
        %v448 = vpop.f32.mrf.mxu0
        %v449 = vadd.f32 0.0, %v448
        %450 = vmatmul.f32.gmra.mxu0 %v335
        %v451 = vpop.f32.mrf.mxu0
        %v452 = vadd.f32 0.0, %v451
        %453 = vmatmul.f32.gmra.mxu0 %v338
        %v454 = vpop.f32.mrf.mxu0
        %v455 = vadd.f32 0.0, %v454
        %456 = vmatmul.f32.gmra.mxu0 %v341
        %v457 = vpop.f32.mrf.mxu0
        %v458 = vadd.f32 0.0, %v457
        %459 = vmatmul.f32.gmra.mxu0 %v344
        %v460 = vpop.f32.mrf.mxu0
        %v461 = vadd.f32 0.0, %v460
        %462 = vmatmul.f32.gmra.mxu0 %v347
        %v463 = vpop.f32.mrf.mxu0
        %v464 = vadd.f32 0.0, %v463
        %465 = vmatmul.f32.gmra.mxu0 %v350
        %v466 = vpop.f32.mrf.mxu0
        %v467 = vadd.f32 0.0, %v466
        %468 = vmatmul.f32.gmra.mxu0 %v353
        %v469 = vpop.f32.mrf.mxu0
        %v470 = vadd.f32 0.0, %v469
        %471 = vmatmul.f32.gmra.mxu0 %v356
        %v472 = vpop.f32.mrf.mxu0
        %v473 = vadd.f32 0.0, %v472
        %474 = vmatmul.f32.gmra.mxu0 %v359
        %v475 = vpop.f32.mrf.mxu0
        %v476 = vadd.f32 0.0, %v475
        %477 = vmatmul.f32.gmra.mxu0 %v362
        %v478 = vpop.f32.mrf.mxu0
        %v479 = vadd.f32 0.0, %v478
        %480 = vmatmul.f32.gmra.mxu0 %v365
        %v481 = vpop.f32.mrf.mxu0
        %v482 = vadd.f32 0.0, %v481
        %483 = vmatmul.f32.gmra.mxu0 %v368
        %v484 = vpop.f32.mrf.mxu0
        %v485 = vadd.f32 0.0, %v484
        %486 = vmatmul.f32.gmra.mxu0 %v371
        %v487 = vpop.f32.mrf.mxu0
        %v488 = vadd.f32 0.0, %v487
        %489 = vdwg.mxu0
        %490 = vset.pattern.permute.xlu0 0
        %491 = vperm.xlu0 %490, %v225
        %v492 = vpop.permute.xlu0 %491
        %494 = vset.pattern.permute.xlu0 0
        %495 = vperm.xlu0 %494, %v226
        %v496 = vpop.permute.xlu0 %495
        %498 = vset.pattern.permute.xlu0 0
        %499 = vperm.xlu0 %498, %v227
        %v500 = vpop.permute.xlu0 %499
        %502 = vset.pattern.permute.xlu0 0
        %503 = vperm.xlu0 %502, %v228
        %v504 = vpop.permute.xlu0 %503
        %506 = vset.pattern.permute.xlu0 0
        %507 = vperm.xlu0 %506, %v229
        %v508 = vpop.permute.xlu0 %507
        %510 = vset.pattern.permute.xlu0 0
        %511 = vperm.xlu0 %510, %v230
        %v512 = vpop.permute.xlu0 %511
        %514 = vset.pattern.permute.xlu0 0
        %515 = vperm.xlu0 %514, %v231
        %v516 = vpop.permute.xlu0 %515
        %518 = vset.pattern.permute.xlu0 0
        %519 = vperm.xlu0 %518, %v232
        %v520 = vpop.permute.xlu0 %519
        %522 = vset.pattern.permute.xlu0 0
        %523 = vperm.xlu0 %522, %v233
        %v524 = vpop.permute.xlu0 %523
        %526 = vset.pattern.permute.xlu0 0
        %527 = vperm.xlu0 %526, %v234
        %v528 = vpop.permute.xlu0 %527
        %530 = vset.pattern.permute.xlu0 0
        %531 = vperm.xlu0 %530, %v235
        %v532 = vpop.permute.xlu0 %531
        %534 = vset.pattern.permute.xlu0 0
        %535 = vperm.xlu0 %534, %v236
        %v536 = vpop.permute.xlu0 %535
        %538 = vset.pattern.permute.xlu0 0
        %539 = vperm.xlu0 %538, %v237
        %v540 = vpop.permute.xlu0 %539
        %542 = vset.pattern.permute.xlu0 0
        %543 = vperm.xlu0 %542, %v238
        %v544 = vpop.permute.xlu0 %543
        %546 = vset.pattern.permute.xlu0 0
        %547 = vperm.xlu0 %546, %v239
        %v548 = vpop.permute.xlu0 %547
        %550 = vset.pattern.permute.xlu0 0
        %551 = vperm.xlu0 %550, %v240
        %v552 = vpop.permute.xlu0 %551
        %554 = vset.pattern.permute.xlu0 0
        %555 = vperm.xlu0 %554, %v241
        %v556 = vpop.permute.xlu0 %555
        %558 = vset.pattern.permute.xlu0 0
        %559 = vperm.xlu0 %558, %v242
        %v560 = vpop.permute.xlu0 %559
        %562 = vset.pattern.permute.xlu0 0
        %563 = vperm.xlu0 %562, %v243
        %v564 = vpop.permute.xlu0 %563
        %566 = vset.pattern.permute.xlu0 0
        %567 = vperm.xlu0 %566, %v244
        %v568 = vpop.permute.xlu0 %567
        %570 = vset.pattern.permute.xlu0 0
        %571 = vperm.xlu0 %570, %v245
        %v572 = vpop.permute.xlu0 %571
        %574 = vset.pattern.permute.xlu0 0
        %575 = vperm.xlu0 %574, %v246
        %v576 = vpop.permute.xlu0 %575
        %578 = vset.pattern.permute.xlu0 0
        %579 = vperm.xlu0 %578, %v247
        %v580 = vpop.permute.xlu0 %579
        %582 = vset.pattern.permute.xlu0 0
        %583 = vperm.xlu0 %582, %v248
        %v584 = vpop.permute.xlu0 %583
        %586 = vset.pattern.permute.xlu0 0
        %587 = vperm.xlu0 %586, %v249
        %v588 = vpop.permute.xlu0 %587
        %590 = vset.pattern.permute.xlu0 0
        %591 = vperm.xlu0 %590, %v250
        %v592 = vpop.permute.xlu0 %591
        %594 = vset.pattern.permute.xlu0 0
        %595 = vperm.xlu0 %594, %v251
        %v596 = vpop.permute.xlu0 %595
        %598 = vset.pattern.permute.xlu0 0
        %599 = vperm.xlu0 %598, %v252
        %v600 = vpop.permute.xlu0 %599
        %602 = vset.pattern.permute.xlu0 0
        %603 = vperm.xlu0 %602, %v253
        %v604 = vpop.permute.xlu0 %603
        %606 = vset.pattern.permute.xlu0 0
        %607 = vperm.xlu0 %606, %v254
        %v608 = vpop.permute.xlu0 %607
        %610 = vset.pattern.permute.xlu0 0
        %611 = vperm.xlu0 %610, %v255
        %v612 = vpop.permute.xlu0 %611
        %614 = vset.pattern.permute.xlu0 0
        %615 = vperm.xlu0 %614, %v256
        %v616 = vpop.permute.xlu0 %615
        %v618 = vmul.f32 %v492, %v395
        %v619 = vmul.f32 %v496, %v398
        %v620 = vmul.f32 %v500, %v401
        %v621 = vmul.f32 %v504, %v404
        %v622 = vmul.f32 %v508, %v407
        %v623 = vmul.f32 %v512, %v410
        %v624 = vmul.f32 %v516, %v413
        %v625 = vmul.f32 %v520, %v416
        %v626 = vmul.f32 %v524, %v419
        %v627 = vmul.f32 %v528, %v422
        %v628 = vmul.f32 %v532, %v425
        %v629 = vmul.f32 %v536, %v428
        %v630 = vmul.f32 %v540, %v431
        %v631 = vmul.f32 %v544, %v434
        %v632 = vmul.f32 %v548, %v437
        %v633 = vmul.f32 %v552, %v440
        %v634 = vmul.f32 %v556, %v443
        %v635 = vmul.f32 %v560, %v446
        %v636 = vmul.f32 %v564, %v449
        %v637 = vmul.f32 %v568, %v452
        %v638 = vmul.f32 %v572, %v455
        %v639 = vmul.f32 %v576, %v458
        %v640 = vmul.f32 %v580, %v461
        %v641 = vmul.f32 %v584, %v464
        %v642 = vmul.f32 %v588, %v467
        %v643 = vmul.f32 %v592, %v470
        %v644 = vmul.f32 %v596, %v473
        %v645 = vmul.f32 %v600, %v476
        %v646 = vmul.f32 %v604, %v479
        %v647 = vmul.f32 %v608, %v482
        %v648 = vmul.f32 %v612, %v485
        %v649 = vmul.f32 %v616, %v488
        %v650 = vadd.f32 %v618, 0.0
        %v651 = vadd.f32 %v619, 0.0
        %v652 = vadd.f32 %v620, 0.0
        %v653 = vadd.f32 %v621, 0.0
        %v654 = vadd.f32 %v622, 0.0
        %v655 = vadd.f32 %v623, 0.0
        %v656 = vadd.f32 %v624, 0.0
        %v657 = vadd.f32 %v625, 0.0
        %v658 = vadd.f32 %v626, 0.0
        %v659 = vadd.f32 %v627, 0.0
        %v660 = vadd.f32 %v628, 0.0
        %v661 = vadd.f32 %v629, 0.0
        %v662 = vadd.f32 %v630, 0.0
        %v663 = vadd.f32 %v631, 0.0
        %v664 = vadd.f32 %v632, 0.0
        %v665 = vadd.f32 %v633, 0.0
        %v666 = vadd.f32 %v634, 0.0
        %v667 = vadd.f32 %v635, 0.0
        %v668 = vadd.f32 %v636, 0.0
        %v669 = vadd.f32 %v637, 0.0
        %v670 = vadd.f32 %v638, 0.0
        %v671 = vadd.f32 %v639, 0.0
        %v672 = vadd.f32 %v640, 0.0
        %v673 = vadd.f32 %v641, 0.0
        %v674 = vadd.f32 %v642, 0.0
        %v675 = vadd.f32 %v643, 0.0
        %v676 = vadd.f32 %v644, 0.0
        %v677 = vadd.f32 %v645, 0.0
        %v678 = vadd.f32 %v646, 0.0
        %v679 = vadd.f32 %v647, 0.0
        %v680 = vadd.f32 %v648, 0.0
        %v681 = vadd.f32 %v649, 0.0
        %s682 = scalar_lea.vmem %s1, 4
        %v683 = vld [vmem:[%s682] sm:$0xf]
        %v685 = vsel %vm373, %v683, 0
        %687 = vmatpush.msra.mxu0 0.0
        %688 = vmatpush.msra.mxu0 0.0
        %689 = vmatpush.msra.mxu0 0.0
        %690 = vmatpush.msra.mxu0 0.0
        %691 = vmatpush.msra.mxu0 0.0
        %692 = vmatpush.msra.mxu0 0.0
        %693 = vmatpush.msra.mxu0 0.0
        %694 = vmatpush.msra.mxu0 0.0
        %695 = vmatpush.msra.mxu0 0.0
        %696 = vmatpush.msra.mxu0 0.0
        %697 = vmatpush.msra.mxu0 0.0
        %698 = vmatpush.msra.mxu0 0.0
        %699 = vmatpush.msra.mxu0 0.0
        %700 = vmatpush.msra.mxu0 0.0
        %701 = vmatpush.msra.mxu0 0.0
        %702 = vmatpush.msra.mxu0 %v685
        %703 = vmatmul.f32.gmra.mxu0 %v278
        %v704 = vpop.f32.mrf.mxu0
        %v705 = vadd.f32 0.0, %v704
        %706 = vmatmul.f32.gmra.mxu0 %v281
        %v707 = vpop.f32.mrf.mxu0
        %v708 = vadd.f32 0.0, %v707
        %709 = vmatmul.f32.gmra.mxu0 %v284
        %v710 = vpop.f32.mrf.mxu0
        %v711 = vadd.f32 0.0, %v710
        %712 = vmatmul.f32.gmra.mxu0 %v287
        %v713 = vpop.f32.mrf.mxu0
        %v714 = vadd.f32 0.0, %v713
        %715 = vmatmul.f32.gmra.mxu0 %v290
        %v716 = vpop.f32.mrf.mxu0
        %v717 = vadd.f32 0.0, %v716
        %718 = vmatmul.f32.gmra.mxu0 %v293
        %v719 = vpop.f32.mrf.mxu0
        %v720 = vadd.f32 0.0, %v719
        %721 = vmatmul.f32.gmra.mxu0 %v296
        %v722 = vpop.f32.mrf.mxu0
        %v723 = vadd.f32 0.0, %v722
        %724 = vmatmul.f32.gmra.mxu0 %v299
        %v725 = vpop.f32.mrf.mxu0
        %v726 = vadd.f32 0.0, %v725
        %727 = vmatmul.f32.gmra.mxu0 %v302
        %v728 = vpop.f32.mrf.mxu0
        %v729 = vadd.f32 0.0, %v728
        %730 = vmatmul.f32.gmra.mxu0 %v305
        %v731 = vpop.f32.mrf.mxu0
        %v732 = vadd.f32 0.0, %v731
        %733 = vmatmul.f32.gmra.mxu0 %v308
        %v734 = vpop.f32.mrf.mxu0
        %v735 = vadd.f32 0.0, %v734
        %736 = vmatmul.f32.gmra.mxu0 %v311
        %v737 = vpop.f32.mrf.mxu0
        %v738 = vadd.f32 0.0, %v737
        %739 = vmatmul.f32.gmra.mxu0 %v314
        %v740 = vpop.f32.mrf.mxu0
        %v741 = vadd.f32 0.0, %v740
        %742 = vmatmul.f32.gmra.mxu0 %v317
        %v743 = vpop.f32.mrf.mxu0
        %v744 = vadd.f32 0.0, %v743
        %745 = vmatmul.f32.gmra.mxu0 %v320
        %v746 = vpop.f32.mrf.mxu0
        %v747 = vadd.f32 0.0, %v746
        %748 = vmatmul.f32.gmra.mxu0 %v323
        %v749 = vpop.f32.mrf.mxu0
        %v750 = vadd.f32 0.0, %v749
        %751 = vmatmul.f32.gmra.mxu0 %v326
        %v752 = vpop.f32.mrf.mxu0
        %v753 = vadd.f32 0.0, %v752
        %754 = vmatmul.f32.gmra.mxu0 %v329
        %v755 = vpop.f32.mrf.mxu0
        %v756 = vadd.f32 0.0, %v755
        %757 = vmatmul.f32.gmra.mxu0 %v332
        %v758 = vpop.f32.mrf.mxu0
        %v759 = vadd.f32 0.0, %v758
        %760 = vmatmul.f32.gmra.mxu0 %v335
        %v761 = vpop.f32.mrf.mxu0
        %v762 = vadd.f32 0.0, %v761
        %763 = vmatmul.f32.gmra.mxu0 %v338
        %v764 = vpop.f32.mrf.mxu0
        %v765 = vadd.f32 0.0, %v764
        %766 = vmatmul.f32.gmra.mxu0 %v341
        %v767 = vpop.f32.mrf.mxu0
        %v768 = vadd.f32 0.0, %v767
        %769 = vmatmul.f32.gmra.mxu0 %v344
        %v770 = vpop.f32.mrf.mxu0
        %v771 = vadd.f32 0.0, %v770
        %772 = vmatmul.f32.gmra.mxu0 %v347
        %v773 = vpop.f32.mrf.mxu0
        %v774 = vadd.f32 0.0, %v773
        %775 = vmatmul.f32.gmra.mxu0 %v350
        %v776 = vpop.f32.mrf.mxu0
        %v777 = vadd.f32 0.0, %v776
        %778 = vmatmul.f32.gmra.mxu0 %v353
        %v779 = vpop.f32.mrf.mxu0
        %v780 = vadd.f32 0.0, %v779
        %781 = vmatmul.f32.gmra.mxu0 %v356
        %v782 = vpop.f32.mrf.mxu0
        %v783 = vadd.f32 0.0, %v782
        %784 = vmatmul.f32.gmra.mxu0 %v359
        %v785 = vpop.f32.mrf.mxu0
        %v786 = vadd.f32 0.0, %v785
        %787 = vmatmul.f32.gmra.mxu0 %v362
        %v788 = vpop.f32.mrf.mxu0
        %v789 = vadd.f32 0.0, %v788
        %790 = vmatmul.f32.gmra.mxu0 %v365
        %v791 = vpop.f32.mrf.mxu0
        %v792 = vadd.f32 0.0, %v791
        %793 = vmatmul.f32.gmra.mxu0 %v368
        %v794 = vpop.f32.mrf.mxu0
        %v795 = vadd.f32 0.0, %v794
        %796 = vmatmul.f32.gmra.mxu0 %v371
        %v797 = vpop.f32.mrf.mxu0
        %v798 = vadd.f32 0.0, %v797
        %799 = vdwg.mxu0
        %800 = vset.pattern.permute.xlu0 1
        %801 = vperm.xlu0 %800, %v225
        %v802 = vpop.permute.xlu0 %801
        %804 = vset.pattern.permute.xlu0 1
        %805 = vperm.xlu0 %804, %v226
        %v806 = vpop.permute.xlu0 %805
        %808 = vset.pattern.permute.xlu0 1
        %809 = vperm.xlu0 %808, %v227
        %v810 = vpop.permute.xlu0 %809
        %812 = vset.pattern.permute.xlu0 1
        %813 = vperm.xlu0 %812, %v228
        %v814 = vpop.permute.xlu0 %813
        %816 = vset.pattern.permute.xlu0 1
        %817 = vperm.xlu0 %816, %v229
        %v818 = vpop.permute.xlu0 %817
        %820 = vset.pattern.permute.xlu0 1
        %821 = vperm.xlu0 %820, %v230
        %v822 = vpop.permute.xlu0 %821
        %824 = vset.pattern.permute.xlu0 1
        %825 = vperm.xlu0 %824, %v231
        %v826 = vpop.permute.xlu0 %825
        %828 = vset.pattern.permute.xlu0 1
        %829 = vperm.xlu0 %828, %v232
        %v830 = vpop.permute.xlu0 %829
        %832 = vset.pattern.permute.xlu0 1
        %833 = vperm.xlu0 %832, %v233
        %v834 = vpop.permute.xlu0 %833
        %836 = vset.pattern.permute.xlu0 1
        %837 = vperm.xlu0 %836, %v234
        %v838 = vpop.permute.xlu0 %837
        %840 = vset.pattern.permute.xlu0 1
        %841 = vperm.xlu0 %840, %v235
        %v842 = vpop.permute.xlu0 %841
        %844 = vset.pattern.permute.xlu0 1
        %845 = vperm.xlu0 %844, %v236
        %v846 = vpop.permute.xlu0 %845
        %848 = vset.pattern.permute.xlu0 1
        %849 = vperm.xlu0 %848, %v237
        %v850 = vpop.permute.xlu0 %849
        %852 = vset.pattern.permute.xlu0 1
        %853 = vperm.xlu0 %852, %v238
        %v854 = vpop.permute.xlu0 %853
        %856 = vset.pattern.permute.xlu0 1
        %857 = vperm.xlu0 %856, %v239
        %v858 = vpop.permute.xlu0 %857
        %860 = vset.pattern.permute.xlu0 1
        %861 = vperm.xlu0 %860, %v240
        %v862 = vpop.permute.xlu0 %861
        %864 = vset.pattern.permute.xlu0 1
        %865 = vperm.xlu0 %864, %v241
        %v866 = vpop.permute.xlu0 %865
        %868 = vset.pattern.permute.xlu0 1
        %869 = vperm.xlu0 %868, %v242
        %v870 = vpop.permute.xlu0 %869
        %872 = vset.pattern.permute.xlu0 1
        %873 = vperm.xlu0 %872, %v243
        %v874 = vpop.permute.xlu0 %873
        %876 = vset.pattern.permute.xlu0 1
        %877 = vperm.xlu0 %876, %v244
        %v878 = vpop.permute.xlu0 %877
        %880 = vset.pattern.permute.xlu0 1
        %881 = vperm.xlu0 %880, %v245
        %v882 = vpop.permute.xlu0 %881
        %884 = vset.pattern.permute.xlu0 1
        %885 = vperm.xlu0 %884, %v246
        %v886 = vpop.permute.xlu0 %885
        %888 = vset.pattern.permute.xlu0 1
        %889 = vperm.xlu0 %888, %v247
        %v890 = vpop.permute.xlu0 %889
        %892 = vset.pattern.permute.xlu0 1
        %893 = vperm.xlu0 %892, %v248
        %v894 = vpop.permute.xlu0 %893
        %896 = vset.pattern.permute.xlu0 1
        %897 = vperm.xlu0 %896, %v249
        %v898 = vpop.permute.xlu0 %897
        %900 = vset.pattern.permute.xlu0 1
        %901 = vperm.xlu0 %900, %v250
        %v902 = vpop.permute.xlu0 %901
        %904 = vset.pattern.permute.xlu0 1
        %905 = vperm.xlu0 %904, %v251
        %v906 = vpop.permute.xlu0 %905
        %908 = vset.pattern.permute.xlu0 1
        %909 = vperm.xlu0 %908, %v252
        %v910 = vpop.permute.xlu0 %909
        %912 = vset.pattern.permute.xlu0 1
        %913 = vperm.xlu0 %912, %v253
        %v914 = vpop.permute.xlu0 %913
        %916 = vset.pattern.permute.xlu0 1
        %917 = vperm.xlu0 %916, %v254
        %v918 = vpop.permute.xlu0 %917
        %920 = vset.pattern.permute.xlu0 1
        %921 = vperm.xlu0 %920, %v255
        %v922 = vpop.permute.xlu0 %921
        %924 = vset.pattern.permute.xlu0 1
        %925 = vperm.xlu0 %924, %v256
        %v926 = vpop.permute.xlu0 %925
        %v928 = vmul.f32 %v802, %v705
        %v929 = vmul.f32 %v806, %v708
        %v930 = vmul.f32 %v810, %v711
        %v931 = vmul.f32 %v814, %v714
        %v932 = vmul.f32 %v818, %v717
        %v933 = vmul.f32 %v822, %v720
        %v934 = vmul.f32 %v826, %v723
        %v935 = vmul.f32 %v830, %v726
        %v936 = vmul.f32 %v834, %v729
        %v937 = vmul.f32 %v838, %v732
        %v938 = vmul.f32 %v842, %v735
        %v939 = vmul.f32 %v846, %v738
        %v940 = vmul.f32 %v850, %v741
        %v941 = vmul.f32 %v854, %v744
        %v942 = vmul.f32 %v858, %v747
        %v943 = vmul.f32 %v862, %v750
        %v944 = vmul.f32 %v866, %v753
        %v945 = vmul.f32 %v870, %v756
        %v946 = vmul.f32 %v874, %v759
        %v947 = vmul.f32 %v878, %v762
        %v948 = vmul.f32 %v882, %v765
        %v949 = vmul.f32 %v886, %v768
        %v950 = vmul.f32 %v890, %v771
        %v951 = vmul.f32 %v894, %v774
        %v952 = vmul.f32 %v898, %v777
        %v953 = vmul.f32 %v902, %v780
        %v954 = vmul.f32 %v906, %v783
        %v955 = vmul.f32 %v910, %v786
        %v956 = vmul.f32 %v914, %v789
        %v957 = vmul.f32 %v918, %v792
        %v958 = vmul.f32 %v922, %v795
        %v959 = vmul.f32 %v926, %v798
        %v960 = vadd.f32 %v650, %v928
        %v961 = vadd.f32 %v651, %v929
        %v962 = vadd.f32 %v652, %v930
        %v963 = vadd.f32 %v653, %v931
        %v964 = vadd.f32 %v654, %v932
        %v965 = vadd.f32 %v655, %v933
        %v966 = vadd.f32 %v656, %v934
        %v967 = vadd.f32 %v657, %v935
        %v968 = vadd.f32 %v658, %v936
        %v969 = vadd.f32 %v659, %v937
        %v970 = vadd.f32 %v660, %v938
        %v971 = vadd.f32 %v661, %v939
        %v972 = vadd.f32 %v662, %v940
        %v973 = vadd.f32 %v663, %v941
        %v974 = vadd.f32 %v664, %v942
        %v975 = vadd.f32 %v665, %v943
        %v976 = vadd.f32 %v666, %v944
        %v977 = vadd.f32 %v667, %v945
        %v978 = vadd.f32 %v668, %v946
        %v979 = vadd.f32 %v669, %v947
        %v980 = vadd.f32 %v670, %v948
        %v981 = vadd.f32 %v671, %v949
        %v982 = vadd.f32 %v672, %v950
        %v983 = vadd.f32 %v673, %v951
        %v984 = vadd.f32 %v674, %v952
        %v985 = vadd.f32 %v675, %v953
        %v986 = vadd.f32 %v676, %v954
        %v987 = vadd.f32 %v677, %v955
        %v988 = vadd.f32 %v678, %v956
        %v989 = vadd.f32 %v679, %v957
        %v990 = vadd.f32 %v680, %v958
        %v991 = vadd.f32 %v681, %v959
        %s992 = scalar_lea.vmem %s1, 8
        %v993 = vld [vmem:[%s992] sm:$0xf]
        %v995 = vsel %vm373, %v993, 0
        %997 = vmatpush.msra.mxu0 0.0
        %998 = vmatpush.msra.mxu0 0.0
        %999 = vmatpush.msra.mxu0 0.0
        %1000 = vmatpush.msra.mxu0 0.0
        %1001 = vmatpush.msra.mxu0 0.0
        %1002 = vmatpush.msra.mxu0 0.0
        %1003 = vmatpush.msra.mxu0 0.0
        %1004 = vmatpush.msra.mxu0 0.0
        %1005 = vmatpush.msra.mxu0 0.0
        %1006 = vmatpush.msra.mxu0 0.0
        %1007 = vmatpush.msra.mxu0 0.0
        %1008 = vmatpush.msra.mxu0 0.0
        %1009 = vmatpush.msra.mxu0 0.0
        %1010 = vmatpush.msra.mxu0 0.0
        %1011 = vmatpush.msra.mxu0 0.0
        %1012 = vmatpush.msra.mxu0 %v995
        %1013 = vmatmul.f32.gmra.mxu0 %v278
        %v1014 = vpop.f32.mrf.mxu0
        %v1015 = vadd.f32 0.0, %v1014
        %1016 = vmatmul.f32.gmra.mxu0 %v281
        %v1017 = vpop.f32.mrf.mxu0
        %v1018 = vadd.f32 0.0, %v1017
        %1019 = vmatmul.f32.gmra.mxu0 %v284
        %v1020 = vpop.f32.mrf.mxu0
        %v1021 = vadd.f32 0.0, %v1020
        %1022 = vmatmul.f32.gmra.mxu0 %v287
        %v1023 = vpop.f32.mrf.mxu0
        %v1024 = vadd.f32 0.0, %v1023
        %1025 = vmatmul.f32.gmra.mxu0 %v290
        %v1026 = vpop.f32.mrf.mxu0
        %v1027 = vadd.f32 0.0, %v1026
        %1028 = vmatmul.f32.gmra.mxu0 %v293
        %v1029 = vpop.f32.mrf.mxu0
        %v1030 = vadd.f32 0.0, %v1029
        %1031 = vmatmul.f32.gmra.mxu0 %v296
        %v1032 = vpop.f32.mrf.mxu0
        %v1033 = vadd.f32 0.0, %v1032
        %1034 = vmatmul.f32.gmra.mxu0 %v299
        %v1035 = vpop.f32.mrf.mxu0
        %v1036 = vadd.f32 0.0, %v1035
        %1037 = vmatmul.f32.gmra.mxu0 %v302
        %v1038 = vpop.f32.mrf.mxu0
        %v1039 = vadd.f32 0.0, %v1038
        %1040 = vmatmul.f32.gmra.mxu0 %v305
        %v1041 = vpop.f32.mrf.mxu0
        %v1042 = vadd.f32 0.0, %v1041
        %1043 = vmatmul.f32.gmra.mxu0 %v308
        %v1044 = vpop.f32.mrf.mxu0
        %v1045 = vadd.f32 0.0, %v1044
        %1046 = vmatmul.f32.gmra.mxu0 %v311
        %v1047 = vpop.f32.mrf.mxu0
        %v1048 = vadd.f32 0.0, %v1047
        %1049 = vmatmul.f32.gmra.mxu0 %v314
        %v1050 = vpop.f32.mrf.mxu0
        %v1051 = vadd.f32 0.0, %v1050
        %1052 = vmatmul.f32.gmra.mxu0 %v317
        %v1053 = vpop.f32.mrf.mxu0
        %v1054 = vadd.f32 0.0, %v1053
        %1055 = vmatmul.f32.gmra.mxu0 %v320
        %v1056 = vpop.f32.mrf.mxu0
        %v1057 = vadd.f32 0.0, %v1056
        %1058 = vmatmul.f32.gmra.mxu0 %v323
        %v1059 = vpop.f32.mrf.mxu0
        %v1060 = vadd.f32 0.0, %v1059
        %1061 = vmatmul.f32.gmra.mxu0 %v326
        %v1062 = vpop.f32.mrf.mxu0
        %v1063 = vadd.f32 0.0, %v1062
        %1064 = vmatmul.f32.gmra.mxu0 %v329
        %v1065 = vpop.f32.mrf.mxu0
        %v1066 = vadd.f32 0.0, %v1065
        %1067 = vmatmul.f32.gmra.mxu0 %v332
        %v1068 = vpop.f32.mrf.mxu0
        %v1069 = vadd.f32 0.0, %v1068
        %1070 = vmatmul.f32.gmra.mxu0 %v335
        %v1071 = vpop.f32.mrf.mxu0
        %v1072 = vadd.f32 0.0, %v1071
        %1073 = vmatmul.f32.gmra.mxu0 %v338
        %v1074 = vpop.f32.mrf.mxu0
        %v1075 = vadd.f32 0.0, %v1074
        %1076 = vmatmul.f32.gmra.mxu0 %v341
        %v1077 = vpop.f32.mrf.mxu0
        %v1078 = vadd.f32 0.0, %v1077
        %1079 = vmatmul.f32.gmra.mxu0 %v344
        %v1080 = vpop.f32.mrf.mxu0
        %v1081 = vadd.f32 0.0, %v1080
        %1082 = vmatmul.f32.gmra.mxu0 %v347
        %v1083 = vpop.f32.mrf.mxu0
        %v1084 = vadd.f32 0.0, %v1083
        %1085 = vmatmul.f32.gmra.mxu0 %v350
        %v1086 = vpop.f32.mrf.mxu0
        %v1087 = vadd.f32 0.0, %v1086
        %1088 = vmatmul.f32.gmra.mxu0 %v353
        %v1089 = vpop.f32.mrf.mxu0
        %v1090 = vadd.f32 0.0, %v1089
        %1091 = vmatmul.f32.gmra.mxu0 %v356
        %v1092 = vpop.f32.mrf.mxu0
        %v1093 = vadd.f32 0.0, %v1092
        %1094 = vmatmul.f32.gmra.mxu0 %v359
        %v1095 = vpop.f32.mrf.mxu0
        %v1096 = vadd.f32 0.0, %v1095
        %1097 = vmatmul.f32.gmra.mxu0 %v362
        %v1098 = vpop.f32.mrf.mxu0
        %v1099 = vadd.f32 0.0, %v1098
        %1100 = vmatmul.f32.gmra.mxu0 %v365
        %v1101 = vpop.f32.mrf.mxu0
        %v1102 = vadd.f32 0.0, %v1101
        %1103 = vmatmul.f32.gmra.mxu0 %v368
        %v1104 = vpop.f32.mrf.mxu0
        %v1105 = vadd.f32 0.0, %v1104
        %1106 = vmatmul.f32.gmra.mxu0 %v371
        %v1107 = vpop.f32.mrf.mxu0
        %v1108 = vadd.f32 0.0, %v1107
        %1109 = vdwg.mxu0
        %1110 = vset.pattern.permute.xlu0 2
        %1111 = vperm.xlu0 %1110, %v225
        %v1112 = vpop.permute.xlu0 %1111
        %1114 = vset.pattern.permute.xlu0 2
        %1115 = vperm.xlu0 %1114, %v226
        %v1116 = vpop.permute.xlu0 %1115
        %1118 = vset.pattern.permute.xlu0 2
        %1119 = vperm.xlu0 %1118, %v227
        %v1120 = vpop.permute.xlu0 %1119
        %1122 = vset.pattern.permute.xlu0 2
        %1123 = vperm.xlu0 %1122, %v228
        %v1124 = vpop.permute.xlu0 %1123
        %1126 = vset.pattern.permute.xlu0 2
        %1127 = vperm.xlu0 %1126, %v229
        %v1128 = vpop.permute.xlu0 %1127
        %1130 = vset.pattern.permute.xlu0 2
        %1131 = vperm.xlu0 %1130, %v230
        %v1132 = vpop.permute.xlu0 %1131
        %1134 = vset.pattern.permute.xlu0 2
        %1135 = vperm.xlu0 %1134, %v231
        %v1136 = vpop.permute.xlu0 %1135
        %1138 = vset.pattern.permute.xlu0 2
        %1139 = vperm.xlu0 %1138, %v232
        %v1140 = vpop.permute.xlu0 %1139
        %1142 = vset.pattern.permute.xlu0 2
        %1143 = vperm.xlu0 %1142, %v233
        %v1144 = vpop.permute.xlu0 %1143
        %1146 = vset.pattern.permute.xlu0 2
        %1147 = vperm.xlu0 %1146, %v234
        %v1148 = vpop.permute.xlu0 %1147
        %1150 = vset.pattern.permute.xlu0 2
        %1151 = vperm.xlu0 %1150, %v235
        %v1152 = vpop.permute.xlu0 %1151
        %1154 = vset.pattern.permute.xlu0 2
        %1155 = vperm.xlu0 %1154, %v236
        %v1156 = vpop.permute.xlu0 %1155
        %1158 = vset.pattern.permute.xlu0 2
        %1159 = vperm.xlu0 %1158, %v237
        %v1160 = vpop.permute.xlu0 %1159
        %1162 = vset.pattern.permute.xlu0 2
        %1163 = vperm.xlu0 %1162, %v238
        %v1164 = vpop.permute.xlu0 %1163
        %1166 = vset.pattern.permute.xlu0 2
        %1167 = vperm.xlu0 %1166, %v239
        %v1168 = vpop.permute.xlu0 %1167
        %1170 = vset.pattern.permute.xlu0 2
        %1171 = vperm.xlu0 %1170, %v240
        %v1172 = vpop.permute.xlu0 %1171
        %1174 = vset.pattern.permute.xlu0 2
        %1175 = vperm.xlu0 %1174, %v241
        %v1176 = vpop.permute.xlu0 %1175
        %1178 = vset.pattern.permute.xlu0 2
        %1179 = vperm.xlu0 %1178, %v242
        %v1180 = vpop.permute.xlu0 %1179
        %1182 = vset.pattern.permute.xlu0 2
        %1183 = vperm.xlu0 %1182, %v243
        %v1184 = vpop.permute.xlu0 %1183
        %1186 = vset.pattern.permute.xlu0 2
        %1187 = vperm.xlu0 %1186, %v244
        %v1188 = vpop.permute.xlu0 %1187
        %1190 = vset.pattern.permute.xlu0 2
        %1191 = vperm.xlu0 %1190, %v245
        %v1192 = vpop.permute.xlu0 %1191
        %1194 = vset.pattern.permute.xlu0 2
        %1195 = vperm.xlu0 %1194, %v246
        %v1196 = vpop.permute.xlu0 %1195
        %1198 = vset.pattern.permute.xlu0 2
        %1199 = vperm.xlu0 %1198, %v247
        %v1200 = vpop.permute.xlu0 %1199
        %1202 = vset.pattern.permute.xlu0 2
        %1203 = vperm.xlu0 %1202, %v248
        %v1204 = vpop.permute.xlu0 %1203
        %1206 = vset.pattern.permute.xlu0 2
        %1207 = vperm.xlu0 %1206, %v249
        %v1208 = vpop.permute.xlu0 %1207
        %1210 = vset.pattern.permute.xlu0 2
        %1211 = vperm.xlu0 %1210, %v250
        %v1212 = vpop.permute.xlu0 %1211
        %1214 = vset.pattern.permute.xlu0 2
        %1215 = vperm.xlu0 %1214, %v251
        %v1216 = vpop.permute.xlu0 %1215
        %1218 = vset.pattern.permute.xlu0 2
        %1219 = vperm.xlu0 %1218, %v252
        %v1220 = vpop.permute.xlu0 %1219
        %1222 = vset.pattern.permute.xlu0 2
        %1223 = vperm.xlu0 %1222, %v253
        %v1224 = vpop.permute.xlu0 %1223
        %1226 = vset.pattern.permute.xlu0 2
        %1227 = vperm.xlu0 %1226, %v254
        %v1228 = vpop.permute.xlu0 %1227
        %1230 = vset.pattern.permute.xlu0 2
        %1231 = vperm.xlu0 %1230, %v255
        %v1232 = vpop.permute.xlu0 %1231
        %1234 = vset.pattern.permute.xlu0 2
        %1235 = vperm.xlu0 %1234, %v256
        %v1236 = vpop.permute.xlu0 %1235
        %v1238 = vmul.f32 %v1112, %v1015
        %v1239 = vmul.f32 %v1116, %v1018
        %v1240 = vmul.f32 %v1120, %v1021
        %v1241 = vmul.f32 %v1124, %v1024
        %v1242 = vmul.f32 %v1128, %v1027
        %v1243 = vmul.f32 %v1132, %v1030
        %v1244 = vmul.f32 %v1136, %v1033
        %v1245 = vmul.f32 %v1140, %v1036
        %v1246 = vmul.f32 %v1144, %v1039
        %v1247 = vmul.f32 %v1148, %v1042
        %v1248 = vmul.f32 %v1152, %v1045
        %v1249 = vmul.f32 %v1156, %v1048
        %v1250 = vmul.f32 %v1160, %v1051
        %v1251 = vmul.f32 %v1164, %v1054
        %v1252 = vmul.f32 %v1168, %v1057
        %v1253 = vmul.f32 %v1172, %v1060
        %v1254 = vmul.f32 %v1176, %v1063
        %v1255 = vmul.f32 %v1180, %v1066
        %v1256 = vmul.f32 %v1184, %v1069
        %v1257 = vmul.f32 %v1188, %v1072
        %v1258 = vmul.f32 %v1192, %v1075
        %v1259 = vmul.f32 %v1196, %v1078
        %v1260 = vmul.f32 %v1200, %v1081
        %v1261 = vmul.f32 %v1204, %v1084
        %v1262 = vmul.f32 %v1208, %v1087
        %v1263 = vmul.f32 %v1212, %v1090
        %v1264 = vmul.f32 %v1216, %v1093
        %v1265 = vmul.f32 %v1220, %v1096
        %v1266 = vmul.f32 %v1224, %v1099
        %v1267 = vmul.f32 %v1228, %v1102
        %v1268 = vmul.f32 %v1232, %v1105
        %v1269 = vmul.f32 %v1236, %v1108
        %v1270 = vadd.f32 %v960, %v1238
        %v1271 = vadd.f32 %v961, %v1239
        %v1272 = vadd.f32 %v962, %v1240
        %v1273 = vadd.f32 %v963, %v1241
        %v1274 = vadd.f32 %v964, %v1242
        %v1275 = vadd.f32 %v965, %v1243
        %v1276 = vadd.f32 %v966, %v1244
        %v1277 = vadd.f32 %v967, %v1245
        %v1278 = vadd.f32 %v968, %v1246
        %v1279 = vadd.f32 %v969, %v1247
        %v1280 = vadd.f32 %v970, %v1248
        %v1281 = vadd.f32 %v971, %v1249
        %v1282 = vadd.f32 %v972, %v1250
        %v1283 = vadd.f32 %v973, %v1251
        %v1284 = vadd.f32 %v974, %v1252
        %v1285 = vadd.f32 %v975, %v1253
        %v1286 = vadd.f32 %v976, %v1254
        %v1287 = vadd.f32 %v977, %v1255
        %v1288 = vadd.f32 %v978, %v1256
        %v1289 = vadd.f32 %v979, %v1257
        %v1290 = vadd.f32 %v980, %v1258
        %v1291 = vadd.f32 %v981, %v1259
        %v1292 = vadd.f32 %v982, %v1260
        %v1293 = vadd.f32 %v983, %v1261
        %v1294 = vadd.f32 %v984, %v1262
        %v1295 = vadd.f32 %v985, %v1263
        %v1296 = vadd.f32 %v986, %v1264
        %v1297 = vadd.f32 %v987, %v1265
        %v1298 = vadd.f32 %v988, %v1266
        %v1299 = vadd.f32 %v989, %v1267
        %v1300 = vadd.f32 %v990, %v1268
        %v1301 = vadd.f32 %v991, %v1269
        %s1302 = scalar_lea.vmem %s1, 12
        %v1303 = vld [vmem:[%s1302] sm:$0xf]
        %v1305 = vsel %vm373, %v1303, 0
        %1307 = vmatpush.msra.mxu0 0.0
        %1308 = vmatpush.msra.mxu0 0.0
        %1309 = vmatpush.msra.mxu0 0.0
        %1310 = vmatpush.msra.mxu0 0.0
        %1311 = vmatpush.msra.mxu0 0.0
        %1312 = vmatpush.msra.mxu0 0.0
        %1313 = vmatpush.msra.mxu0 0.0
        %1314 = vmatpush.msra.mxu0 0.0
        %1315 = vmatpush.msra.mxu0 0.0
        %1316 = vmatpush.msra.mxu0 0.0
        %1317 = vmatpush.msra.mxu0 0.0
        %1318 = vmatpush.msra.mxu0 0.0
        %1319 = vmatpush.msra.mxu0 0.0
        %1320 = vmatpush.msra.mxu0 0.0
        %1321 = vmatpush.msra.mxu0 0.0
        %1322 = vmatpush.msra.mxu0 %v1305
        %1323 = vmatmul.f32.gmra.mxu0 %v278
        %v1324 = vpop.f32.mrf.mxu0
        %v1325 = vadd.f32 0.0, %v1324
        %1326 = vmatmul.f32.gmra.mxu0 %v281
        %v1327 = vpop.f32.mrf.mxu0
        %v1328 = vadd.f32 0.0, %v1327
        %1329 = vmatmul.f32.gmra.mxu0 %v284
        %v1330 = vpop.f32.mrf.mxu0
        %v1331 = vadd.f32 0.0, %v1330
        %1332 = vmatmul.f32.gmra.mxu0 %v287
        %v1333 = vpop.f32.mrf.mxu0
        %v1334 = vadd.f32 0.0, %v1333
        %1335 = vmatmul.f32.gmra.mxu0 %v290
        %v1336 = vpop.f32.mrf.mxu0
        %v1337 = vadd.f32 0.0, %v1336
        %1338 = vmatmul.f32.gmra.mxu0 %v293
        %v1339 = vpop.f32.mrf.mxu0
        %v1340 = vadd.f32 0.0, %v1339
        %1341 = vmatmul.f32.gmra.mxu0 %v296
        %v1342 = vpop.f32.mrf.mxu0
        %v1343 = vadd.f32 0.0, %v1342
        %1344 = vmatmul.f32.gmra.mxu0 %v299
        %v1345 = vpop.f32.mrf.mxu0
        %v1346 = vadd.f32 0.0, %v1345
        %1347 = vmatmul.f32.gmra.mxu0 %v302
        %v1348 = vpop.f32.mrf.mxu0
        %v1349 = vadd.f32 0.0, %v1348
        %1350 = vmatmul.f32.gmra.mxu0 %v305
        %v1351 = vpop.f32.mrf.mxu0
        %v1352 = vadd.f32 0.0, %v1351
        %1353 = vmatmul.f32.gmra.mxu0 %v308
        %v1354 = vpop.f32.mrf.mxu0
        %v1355 = vadd.f32 0.0, %v1354
        %1356 = vmatmul.f32.gmra.mxu0 %v311
        %v1357 = vpop.f32.mrf.mxu0
        %v1358 = vadd.f32 0.0, %v1357
        %1359 = vmatmul.f32.gmra.mxu0 %v314
        %v1360 = vpop.f32.mrf.mxu0
        %v1361 = vadd.f32 0.0, %v1360
        %1362 = vmatmul.f32.gmra.mxu0 %v317
        %v1363 = vpop.f32.mrf.mxu0
        %v1364 = vadd.f32 0.0, %v1363
        %1365 = vmatmul.f32.gmra.mxu0 %v320
        %v1366 = vpop.f32.mrf.mxu0
        %v1367 = vadd.f32 0.0, %v1366
        %1368 = vmatmul.f32.gmra.mxu0 %v323
        %v1369 = vpop.f32.mrf.mxu0
        %v1370 = vadd.f32 0.0, %v1369
        %1371 = vmatmul.f32.gmra.mxu0 %v326
        %v1372 = vpop.f32.mrf.mxu0
        %v1373 = vadd.f32 0.0, %v1372
        %1374 = vmatmul.f32.gmra.mxu0 %v329
        %v1375 = vpop.f32.mrf.mxu0
        %v1376 = vadd.f32 0.0, %v1375
        %1377 = vmatmul.f32.gmra.mxu0 %v332
        %v1378 = vpop.f32.mrf.mxu0
        %v1379 = vadd.f32 0.0, %v1378
        %1380 = vmatmul.f32.gmra.mxu0 %v335
        %v1381 = vpop.f32.mrf.mxu0
        %v1382 = vadd.f32 0.0, %v1381
        %1383 = vmatmul.f32.gmra.mxu0 %v338
        %v1384 = vpop.f32.mrf.mxu0
        %v1385 = vadd.f32 0.0, %v1384
        %1386 = vmatmul.f32.gmra.mxu0 %v341
        %v1387 = vpop.f32.mrf.mxu0
        %v1388 = vadd.f32 0.0, %v1387
        %1389 = vmatmul.f32.gmra.mxu0 %v344
        %v1390 = vpop.f32.mrf.mxu0
        %v1391 = vadd.f32 0.0, %v1390
        %1392 = vmatmul.f32.gmra.mxu0 %v347
        %v1393 = vpop.f32.mrf.mxu0
        %v1394 = vadd.f32 0.0, %v1393
        %1395 = vmatmul.f32.gmra.mxu0 %v350
        %v1396 = vpop.f32.mrf.mxu0
        %v1397 = vadd.f32 0.0, %v1396
        %1398 = vmatmul.f32.gmra.mxu0 %v353
        %v1399 = vpop.f32.mrf.mxu0
        %v1400 = vadd.f32 0.0, %v1399
        %1401 = vmatmul.f32.gmra.mxu0 %v356
        %v1402 = vpop.f32.mrf.mxu0
        %v1403 = vadd.f32 0.0, %v1402
        %1404 = vmatmul.f32.gmra.mxu0 %v359
        %v1405 = vpop.f32.mrf.mxu0
        %v1406 = vadd.f32 0.0, %v1405
        %1407 = vmatmul.f32.gmra.mxu0 %v362
        %v1408 = vpop.f32.mrf.mxu0
        %v1409 = vadd.f32 0.0, %v1408
        %1410 = vmatmul.f32.gmra.mxu0 %v365
        %v1411 = vpop.f32.mrf.mxu0
        %v1412 = vadd.f32 0.0, %v1411
        %1413 = vmatmul.f32.gmra.mxu0 %v368
        %v1414 = vpop.f32.mrf.mxu0
        %v1415 = vadd.f32 0.0, %v1414
        %1416 = vmatmul.f32.gmra.mxu0 %v371
        %v1417 = vpop.f32.mrf.mxu0
        %v1418 = vadd.f32 0.0, %v1417
        %1419 = vdwg.mxu0
        %1420 = vset.pattern.permute.xlu0 3
        %1421 = vperm.xlu0 %1420, %v225
        %v1422 = vpop.permute.xlu0 %1421
        %1424 = vset.pattern.permute.xlu0 3
        %1425 = vperm.xlu0 %1424, %v226
        %v1426 = vpop.permute.xlu0 %1425
        %1428 = vset.pattern.permute.xlu0 3
        %1429 = vperm.xlu0 %1428, %v227
        %v1430 = vpop.permute.xlu0 %1429
        %1432 = vset.pattern.permute.xlu0 3
        %1433 = vperm.xlu0 %1432, %v228
        %v1434 = vpop.permute.xlu0 %1433
        %1436 = vset.pattern.permute.xlu0 3
        %1437 = vperm.xlu0 %1436, %v229
        %v1438 = vpop.permute.xlu0 %1437
        %1440 = vset.pattern.permute.xlu0 3
        %1441 = vperm.xlu0 %1440, %v230
        %v1442 = vpop.permute.xlu0 %1441
        %1444 = vset.pattern.permute.xlu0 3
        %1445 = vperm.xlu0 %1444, %v231
        %v1446 = vpop.permute.xlu0 %1445
        %1448 = vset.pattern.permute.xlu0 3
        %1449 = vperm.xlu0 %1448, %v232
        %v1450 = vpop.permute.xlu0 %1449
        %1452 = vset.pattern.permute.xlu0 3
        %1453 = vperm.xlu0 %1452, %v233
        %v1454 = vpop.permute.xlu0 %1453
        %1456 = vset.pattern.permute.xlu0 3
        %1457 = vperm.xlu0 %1456, %v234
        %v1458 = vpop.permute.xlu0 %1457
        %1460 = vset.pattern.permute.xlu0 3
        %1461 = vperm.xlu0 %1460, %v235
        %v1462 = vpop.permute.xlu0 %1461
        %1464 = vset.pattern.permute.xlu0 3
        %1465 = vperm.xlu0 %1464, %v236
        %v1466 = vpop.permute.xlu0 %1465
        %1468 = vset.pattern.permute.xlu0 3
        %1469 = vperm.xlu0 %1468, %v237
        %v1470 = vpop.permute.xlu0 %1469
        %1472 = vset.pattern.permute.xlu0 3
        %1473 = vperm.xlu0 %1472, %v238
        %v1474 = vpop.permute.xlu0 %1473
        %1476 = vset.pattern.permute.xlu0 3
        %1477 = vperm.xlu0 %1476, %v239
        %v1478 = vpop.permute.xlu0 %1477
        %1480 = vset.pattern.permute.xlu0 3
        %1481 = vperm.xlu0 %1480, %v240
        %v1482 = vpop.permute.xlu0 %1481
        %1484 = vset.pattern.permute.xlu0 3
        %1485 = vperm.xlu0 %1484, %v241
        %v1486 = vpop.permute.xlu0 %1485
        %1488 = vset.pattern.permute.xlu0 3
        %1489 = vperm.xlu0 %1488, %v242
        %v1490 = vpop.permute.xlu0 %1489
        %1492 = vset.pattern.permute.xlu0 3
        %1493 = vperm.xlu0 %1492, %v243
        %v1494 = vpop.permute.xlu0 %1493
        %1496 = vset.pattern.permute.xlu0 3
        %1497 = vperm.xlu0 %1496, %v244
        %v1498 = vpop.permute.xlu0 %1497
        %1500 = vset.pattern.permute.xlu0 3
        %1501 = vperm.xlu0 %1500, %v245
        %v1502 = vpop.permute.xlu0 %1501
        %1504 = vset.pattern.permute.xlu0 3
        %1505 = vperm.xlu0 %1504, %v246
        %v1506 = vpop.permute.xlu0 %1505
        %1508 = vset.pattern.permute.xlu0 3
        %1509 = vperm.xlu0 %1508, %v247
        %v1510 = vpop.permute.xlu0 %1509
        %1512 = vset.pattern.permute.xlu0 3
        %1513 = vperm.xlu0 %1512, %v248
        %v1514 = vpop.permute.xlu0 %1513
        %1516 = vset.pattern.permute.xlu0 3
        %1517 = vperm.xlu0 %1516, %v249
        %v1518 = vpop.permute.xlu0 %1517
        %1520 = vset.pattern.permute.xlu0 3
        %1521 = vperm.xlu0 %1520, %v250
        %v1522 = vpop.permute.xlu0 %1521
        %1524 = vset.pattern.permute.xlu0 3
        %1525 = vperm.xlu0 %1524, %v251
        %v1526 = vpop.permute.xlu0 %1525
        %1528 = vset.pattern.permute.xlu0 3
        %1529 = vperm.xlu0 %1528, %v252
        %v1530 = vpop.permute.xlu0 %1529
        %1532 = vset.pattern.permute.xlu0 3
        %1533 = vperm.xlu0 %1532, %v253
        %v1534 = vpop.permute.xlu0 %1533
        %1536 = vset.pattern.permute.xlu0 3
        %1537 = vperm.xlu0 %1536, %v254
        %v1538 = vpop.permute.xlu0 %1537
        %1540 = vset.pattern.permute.xlu0 3
        %1541 = vperm.xlu0 %1540, %v255
        %v1542 = vpop.permute.xlu0 %1541
        %1544 = vset.pattern.permute.xlu0 3
        %1545 = vperm.xlu0 %1544, %v256
        %v1546 = vpop.permute.xlu0 %1545
        %v1548 = vmul.f32 %v1422, %v1325
        %v1549 = vmul.f32 %v1426, %v1328
        %v1550 = vmul.f32 %v1430, %v1331
        %v1551 = vmul.f32 %v1434, %v1334
        %v1552 = vmul.f32 %v1438, %v1337
        %v1553 = vmul.f32 %v1442, %v1340
        %v1554 = vmul.f32 %v1446, %v1343
        %v1555 = vmul.f32 %v1450, %v1346
        %v1556 = vmul.f32 %v1454, %v1349
        %v1557 = vmul.f32 %v1458, %v1352
        %v1558 = vmul.f32 %v1462, %v1355
        %v1559 = vmul.f32 %v1466, %v1358
        %v1560 = vmul.f32 %v1470, %v1361
        %v1561 = vmul.f32 %v1474, %v1364
        %v1562 = vmul.f32 %v1478, %v1367
        %v1563 = vmul.f32 %v1482, %v1370
        %v1564 = vmul.f32 %v1486, %v1373
        %v1565 = vmul.f32 %v1490, %v1376
        %v1566 = vmul.f32 %v1494, %v1379
        %v1567 = vmul.f32 %v1498, %v1382
        %v1568 = vmul.f32 %v1502, %v1385
        %v1569 = vmul.f32 %v1506, %v1388
        %v1570 = vmul.f32 %v1510, %v1391
        %v1571 = vmul.f32 %v1514, %v1394
        %v1572 = vmul.f32 %v1518, %v1397
        %v1573 = vmul.f32 %v1522, %v1400
        %v1574 = vmul.f32 %v1526, %v1403
        %v1575 = vmul.f32 %v1530, %v1406
        %v1576 = vmul.f32 %v1534, %v1409
        %v1577 = vmul.f32 %v1538, %v1412
        %v1578 = vmul.f32 %v1542, %v1415
        %v1579 = vmul.f32 %v1546, %v1418
        %v1580 = vadd.f32 %v1270, %v1548
        %v1581 = vadd.f32 %v1271, %v1549
        %v1582 = vadd.f32 %v1272, %v1550
        %v1583 = vadd.f32 %v1273, %v1551
        %v1584 = vadd.f32 %v1274, %v1552
        %v1585 = vadd.f32 %v1275, %v1553
        %v1586 = vadd.f32 %v1276, %v1554
        %v1587 = vadd.f32 %v1277, %v1555
        %v1588 = vadd.f32 %v1278, %v1556
        %v1589 = vadd.f32 %v1279, %v1557
        %v1590 = vadd.f32 %v1280, %v1558
        %v1591 = vadd.f32 %v1281, %v1559
        %v1592 = vadd.f32 %v1282, %v1560
        %v1593 = vadd.f32 %v1283, %v1561
        %v1594 = vadd.f32 %v1284, %v1562
        %v1595 = vadd.f32 %v1285, %v1563
        %v1596 = vadd.f32 %v1286, %v1564
        %v1597 = vadd.f32 %v1287, %v1565
        %v1598 = vadd.f32 %v1288, %v1566
        %v1599 = vadd.f32 %v1289, %v1567
        %v1600 = vadd.f32 %v1290, %v1568
        %v1601 = vadd.f32 %v1291, %v1569
        %v1602 = vadd.f32 %v1292, %v1570
        %v1603 = vadd.f32 %v1293, %v1571
        %v1604 = vadd.f32 %v1294, %v1572
        %v1605 = vadd.f32 %v1295, %v1573
        %v1606 = vadd.f32 %v1296, %v1574
        %v1607 = vadd.f32 %v1297, %v1575
        %v1608 = vadd.f32 %v1298, %v1576
        %v1609 = vadd.f32 %v1299, %v1577
        %v1610 = vadd.f32 %v1300, %v1578
        %v1611 = vadd.f32 %v1301, %v1579
        %v1613 = vperm.slane %v274, 0
        %v1615 = vadd.f32 %v1580, %v1613
        %v1616 = vadd.f32 %v1581, %v1613
        %v1617 = vadd.f32 %v1582, %v1613
        %v1618 = vadd.f32 %v1583, %v1613
        %v1619 = vadd.f32 %v1584, %v1613
        %v1620 = vadd.f32 %v1585, %v1613
        %v1621 = vadd.f32 %v1586, %v1613
        %v1622 = vadd.f32 %v1587, %v1613
        %v1623 = vadd.f32 %v1588, %v1613
        %v1624 = vadd.f32 %v1589, %v1613
        %v1625 = vadd.f32 %v1590, %v1613
        %v1626 = vadd.f32 %v1591, %v1613
        %v1627 = vadd.f32 %v1592, %v1613
        %v1628 = vadd.f32 %v1593, %v1613
        %v1629 = vadd.f32 %v1594, %v1613
        %v1630 = vadd.f32 %v1595, %v1613
        %v1631 = vadd.f32 %v1596, %v1613
        %v1632 = vadd.f32 %v1597, %v1613
        %v1633 = vadd.f32 %v1598, %v1613
        %v1634 = vadd.f32 %v1599, %v1613
        %v1635 = vadd.f32 %v1600, %v1613
        %v1636 = vadd.f32 %v1601, %v1613
        %v1637 = vadd.f32 %v1602, %v1613
        %v1638 = vadd.f32 %v1603, %v1613
        %v1639 = vadd.f32 %v1604, %v1613
        %v1640 = vadd.f32 %v1605, %v1613
        %v1641 = vadd.f32 %v1606, %v1613
        %v1642 = vadd.f32 %v1607, %v1613
        %v1643 = vadd.f32 %v1608, %v1613
        %v1644 = vadd.f32 %v1609, %v1613
        %v1645 = vadd.f32 %v1610, %v1613
        %v1646 = vadd.f32 %v1611, %v1613
        %v1647 = vmax.f32 %v1615, 0.0
        %v1648 = vmax.f32 %v1616, 0.0
        %v1649 = vmax.f32 %v1617, 0.0
        %v1650 = vmax.f32 %v1618, 0.0
        %v1651 = vmax.f32 %v1619, 0.0
        %v1652 = vmax.f32 %v1620, 0.0
        %v1653 = vmax.f32 %v1621, 0.0
        %v1654 = vmax.f32 %v1622, 0.0
        %v1655 = vmax.f32 %v1623, 0.0
        %v1656 = vmax.f32 %v1624, 0.0
        %v1657 = vmax.f32 %v1625, 0.0
        %v1658 = vmax.f32 %v1626, 0.0
        %v1659 = vmax.f32 %v1627, 0.0
        %v1660 = vmax.f32 %v1628, 0.0
        %v1661 = vmax.f32 %v1629, 0.0
        %v1662 = vmax.f32 %v1630, 0.0
        %v1663 = vmax.f32 %v1631, 0.0
        %v1664 = vmax.f32 %v1632, 0.0
        %v1665 = vmax.f32 %v1633, 0.0
        %v1666 = vmax.f32 %v1634, 0.0
        %v1667 = vmax.f32 %v1635, 0.0
        %v1668 = vmax.f32 %v1636, 0.0
        %v1669 = vmax.f32 %v1637, 0.0
        %v1670 = vmax.f32 %v1638, 0.0
        %v1671 = vmax.f32 %v1639, 0.0
        %v1672 = vmax.f32 %v1640, 0.0
        %v1673 = vmax.f32 %v1641, 0.0
        %v1674 = vmax.f32 %v1642, 0.0
        %v1675 = vmax.f32 %v1643, 0.0
        %v1676 = vmax.f32 %v1644, 0.0
        %v1677 = vmax.f32 %v1645, 0.0
        %v1678 = vmax.f32 %v1646, 0.0
        %1711 = vrot.lane.b32.xlu0 %v1647, 64
        %v1712 = vpop.permute.xlu0 %1711
        %1713 = vrot.lane.b32.xlu0 %v1648, 64
        %v1714 = vpop.permute.xlu0 %1713
        %1715 = vrot.lane.b32.xlu0 %v1649, 64
        %v1716 = vpop.permute.xlu0 %1715
        %1717 = vrot.lane.b32.xlu0 %v1650, 64
        %v1718 = vpop.permute.xlu0 %1717
        %1719 = vrot.lane.b32.xlu0 %v1651, 64
        %v1720 = vpop.permute.xlu0 %1719
        %1721 = vrot.lane.b32.xlu0 %v1652, 64
        %v1722 = vpop.permute.xlu0 %1721
        %1723 = vrot.lane.b32.xlu0 %v1653, 64
        %v1724 = vpop.permute.xlu0 %1723
        %1725 = vrot.lane.b32.xlu0 %v1654, 64
        %v1726 = vpop.permute.xlu0 %1725
        %1727 = vrot.lane.b32.xlu0 %v1655, 64
        %v1728 = vpop.permute.xlu0 %1727
        %1729 = vrot.lane.b32.xlu0 %v1656, 64
        %v1730 = vpop.permute.xlu0 %1729
        %1731 = vrot.lane.b32.xlu0 %v1657, 64
        %v1732 = vpop.permute.xlu0 %1731
        %1733 = vrot.lane.b32.xlu0 %v1658, 64
        %v1734 = vpop.permute.xlu0 %1733
        %1735 = vrot.lane.b32.xlu0 %v1659, 64
        %v1736 = vpop.permute.xlu0 %1735
        %1737 = vrot.lane.b32.xlu0 %v1660, 64
        %v1738 = vpop.permute.xlu0 %1737
        %1739 = vrot.lane.b32.xlu0 %v1661, 64
        %v1740 = vpop.permute.xlu0 %1739
        %1741 = vrot.lane.b32.xlu0 %v1662, 64
        %v1742 = vpop.permute.xlu0 %1741
        %1743 = vrot.lane.b32.xlu0 %v1663, 64
        %v1744 = vpop.permute.xlu0 %1743
        %1745 = vrot.lane.b32.xlu0 %v1664, 64
        %v1746 = vpop.permute.xlu0 %1745
        %1747 = vrot.lane.b32.xlu0 %v1665, 64
        %v1748 = vpop.permute.xlu0 %1747
        %1749 = vrot.lane.b32.xlu0 %v1666, 64
        %v1750 = vpop.permute.xlu0 %1749
        %1751 = vrot.lane.b32.xlu0 %v1667, 64
        %v1752 = vpop.permute.xlu0 %1751
        %1753 = vrot.lane.b32.xlu0 %v1668, 64
        %v1754 = vpop.permute.xlu0 %1753
        %1755 = vrot.lane.b32.xlu0 %v1669, 64
        %v1756 = vpop.permute.xlu0 %1755
        %1757 = vrot.lane.b32.xlu0 %v1670, 64
        %v1758 = vpop.permute.xlu0 %1757
        %1759 = vrot.lane.b32.xlu0 %v1671, 64
        %v1760 = vpop.permute.xlu0 %1759
        %1761 = vrot.lane.b32.xlu0 %v1672, 64
        %v1762 = vpop.permute.xlu0 %1761
        %1763 = vrot.lane.b32.xlu0 %v1673, 64
        %v1764 = vpop.permute.xlu0 %1763
        %1765 = vrot.lane.b32.xlu0 %v1674, 64
        %v1766 = vpop.permute.xlu0 %1765
        %1767 = vrot.lane.b32.xlu0 %v1675, 64
        %v1768 = vpop.permute.xlu0 %1767
        %1769 = vrot.lane.b32.xlu0 %v1676, 64
        %v1770 = vpop.permute.xlu0 %1769
        %1771 = vrot.lane.b32.xlu0 %v1677, 64
        %v1772 = vpop.permute.xlu0 %1771
        %1773 = vrot.lane.b32.xlu0 %v1678, 64
        %v1774 = vpop.permute.xlu0 %1773
        %1807 = vmatpush.msra.mxu0 %v1742
        %1808 = vmatpush.msra.mxu0 %v1740
        %1809 = vmatpush.msra.mxu0 %v1738
        %1810 = vmatpush.msra.mxu0 %v1736
        %1811 = vmatpush.msra.mxu0 %v1734
        %1812 = vmatpush.msra.mxu0 %v1732
        %1813 = vmatpush.msra.mxu0 %v1730
        %1814 = vmatpush.msra.mxu0 %v1728
        %1815 = vmatpush.msra.mxu0 %v1726
        %1816 = vmatpush.msra.mxu0 %v1724
        %1817 = vmatpush.msra.mxu0 %v1722
        %1818 = vmatpush.msra.mxu0 %v1720
        %1819 = vmatpush.msra.mxu0 %v1718
        %1820 = vmatpush.msra.mxu0 %v1716
        %1821 = vmatpush.msra.mxu0 %v1714
        %1822 = vmatpush.msra.mxu0 %v1712
        %1823 = vmatmul.f32.gmra.mxu0 %v272
        %v1824 = vpop.f32.mrf.mxu0
        %v1825 = vadd.f32 0.0, %v1824
        %1826 = vdwg.mxu0
        %1827 = vmatpush.msra.mxu0 %v1774
        %1828 = vmatpush.msra.mxu0 %v1772
        %1829 = vmatpush.msra.mxu0 %v1770
        %1830 = vmatpush.msra.mxu0 %v1768
        %1831 = vmatpush.msra.mxu0 %v1766
        %1832 = vmatpush.msra.mxu0 %v1764
        %1833 = vmatpush.msra.mxu0 %v1762
        %1834 = vmatpush.msra.mxu0 %v1760
        %1835 = vmatpush.msra.mxu0 %v1758
        %1836 = vmatpush.msra.mxu0 %v1756
        %1837 = vmatpush.msra.mxu0 %v1754
        %1838 = vmatpush.msra.mxu0 %v1752
        %1839 = vmatpush.msra.mxu0 %v1750
        %1840 = vmatpush.msra.mxu0 %v1748
        %1841 = vmatpush.msra.mxu0 %v1746
        %1842 = vmatpush.msra.mxu0 %v1744
        %1843 = vmatmul.f32.gmra.mxu0 %v273
        %v1844 = vpop.f32.mrf.mxu0
        %v1845 = vadd.f32 %v1825, %v1844
        %1846 = vdwg.mxu0
        %vm1847 = vcmask 523264
        %1848 = vst.msk [vmem:[%s218] sm:$0xff] %vm1847, %v1845
        %v1849 = vld [vmem:[%s4] sm:$0x1]
        %v1850 = vld [vmem:[%s2] sm:$0xff]
        %v1851 = vld [vmem:[%s2 + $0x8] sm:$0xff]
        %v1852 = vld [vmem:[%s2 + $0x10] sm:$0xff]
        %v1853 = vld [vmem:[%s2 + $0x18] sm:$0xff]
        %v1854 = vld [vmem:[%s2 + $0x20] sm:$0xff]
        %v1855 = vld [vmem:[%s2 + $0x28] sm:$0xff]
        %v1856 = vld [vmem:[%s2 + $0x30] sm:$0xff]
        %v1857 = vld [vmem:[%s2 + $0x38] sm:$0xff]
        %v1858 = vsel %vm1847, %v1647, 0
        %v1860 = vsel %vm1847, %v1648, 0
        %v1862 = vsel %vm1847, %v1649, 0
        %v1864 = vsel %vm1847, %v1650, 0
        %v1866 = vsel %vm1847, %v1651, 0
        %v1868 = vsel %vm1847, %v1652, 0
        %v1870 = vsel %vm1847, %v1653, 0
        %v1872 = vsel %vm1847, %v1654, 0
        %v1874 = vsel %vm1847, %v1655, 0
        %v1876 = vsel %vm1847, %v1656, 0
        %v1878 = vsel %vm1847, %v1657, 0
        %v1880 = vsel %vm1847, %v1658, 0
        %v1882 = vsel %vm1847, %v1659, 0
        %v1884 = vsel %vm1847, %v1660, 0
        %v1886 = vsel %vm1847, %v1661, 0
        %v1888 = vsel %vm1847, %v1662, 0
        %v1890 = vsel %vm1847, %v1663, 0
        %v1892 = vsel %vm1847, %v1664, 0
        %v1894 = vsel %vm1847, %v1665, 0
        %v1896 = vsel %vm1847, %v1666, 0
        %v1898 = vsel %vm1847, %v1667, 0
        %v1900 = vsel %vm1847, %v1668, 0
        %v1902 = vsel %vm1847, %v1669, 0
        %v1904 = vsel %vm1847, %v1670, 0
        %v1906 = vsel %vm1847, %v1671, 0
        %v1908 = vsel %vm1847, %v1672, 0
        %v1910 = vsel %vm1847, %v1673, 0
        %v1912 = vsel %vm1847, %v1674, 0
        %v1914 = vsel %vm1847, %v1675, 0
        %v1916 = vsel %vm1847, %v1676, 0
        %v1918 = vsel %vm1847, %v1677, 0
        %v1920 = vsel %vm1847, %v1678, 0
        %1922 = vmatpush.msra.mxu0 0.0
        %1923 = vmatpush.msra.mxu0 0.0
        %1924 = vmatpush.msra.mxu0 0.0
        %1925 = vmatpush.msra.mxu0 0.0
        %1926 = vmatpush.msra.mxu0 0.0
        %1927 = vmatpush.msra.mxu0 0.0
        %1928 = vmatpush.msra.mxu0 0.0
        %1929 = vmatpush.msra.mxu0 0.0
        %1930 = vmatpush.msra.mxu0 %v1857
        %1931 = vmatpush.msra.mxu0 %v1856
        %1932 = vmatpush.msra.mxu0 %v1855
        %1933 = vmatpush.msra.mxu0 %v1854
        %1934 = vmatpush.msra.mxu0 %v1853
        %1935 = vmatpush.msra.mxu0 %v1852
        %1936 = vmatpush.msra.mxu0 %v1851
        %1937 = vmatpush.msra.mxu0 %v1850
        %1938 = vmatmul.f32.gmra.mxu0 %v1858
        %v1939 = vpop.f32.mrf.mxu0
        %v1940 = vadd.f32 0.0, %v1939
        %1941 = vmatmul.f32.gmra.mxu0 %v1860
        %v1942 = vpop.f32.mrf.mxu0
        %v1943 = vadd.f32 0.0, %v1942
        %1944 = vmatmul.f32.gmra.mxu0 %v1862
        %v1945 = vpop.f32.mrf.mxu0
        %v1946 = vadd.f32 0.0, %v1945
        %1947 = vmatmul.f32.gmra.mxu0 %v1864
        %v1948 = vpop.f32.mrf.mxu0
        %v1949 = vadd.f32 0.0, %v1948
        %1950 = vmatmul.f32.gmra.mxu0 %v1866
        %v1951 = vpop.f32.mrf.mxu0
        %v1952 = vadd.f32 0.0, %v1951
        %1953 = vmatmul.f32.gmra.mxu0 %v1868
        %v1954 = vpop.f32.mrf.mxu0
        %v1955 = vadd.f32 0.0, %v1954
        %1956 = vmatmul.f32.gmra.mxu0 %v1870
        %v1957 = vpop.f32.mrf.mxu0
        %v1958 = vadd.f32 0.0, %v1957
        %1959 = vmatmul.f32.gmra.mxu0 %v1872
        %v1960 = vpop.f32.mrf.mxu0
        %v1961 = vadd.f32 0.0, %v1960
        %1962 = vmatmul.f32.gmra.mxu0 %v1874
        %v1963 = vpop.f32.mrf.mxu0
        %v1964 = vadd.f32 0.0, %v1963
        %1965 = vmatmul.f32.gmra.mxu0 %v1876
        %v1966 = vpop.f32.mrf.mxu0
        %v1967 = vadd.f32 0.0, %v1966
        %1968 = vmatmul.f32.gmra.mxu0 %v1878
        %v1969 = vpop.f32.mrf.mxu0
        %v1970 = vadd.f32 0.0, %v1969
        %1971 = vmatmul.f32.gmra.mxu0 %v1880
        %v1972 = vpop.f32.mrf.mxu0
        %v1973 = vadd.f32 0.0, %v1972
        %1974 = vmatmul.f32.gmra.mxu0 %v1882
        %v1975 = vpop.f32.mrf.mxu0
        %v1976 = vadd.f32 0.0, %v1975
        %1977 = vmatmul.f32.gmra.mxu0 %v1884
        %v1978 = vpop.f32.mrf.mxu0
        %v1979 = vadd.f32 0.0, %v1978
        %1980 = vmatmul.f32.gmra.mxu0 %v1886
        %v1981 = vpop.f32.mrf.mxu0
        %v1982 = vadd.f32 0.0, %v1981
        %1983 = vmatmul.f32.gmra.mxu0 %v1888
        %v1984 = vpop.f32.mrf.mxu0
        %v1985 = vadd.f32 0.0, %v1984
        %1986 = vmatmul.f32.gmra.mxu0 %v1890
        %v1987 = vpop.f32.mrf.mxu0
        %v1988 = vadd.f32 0.0, %v1987
        %1989 = vmatmul.f32.gmra.mxu0 %v1892
        %v1990 = vpop.f32.mrf.mxu0
        %v1991 = vadd.f32 0.0, %v1990
        %1992 = vmatmul.f32.gmra.mxu0 %v1894
        %v1993 = vpop.f32.mrf.mxu0
        %v1994 = vadd.f32 0.0, %v1993
        %1995 = vmatmul.f32.gmra.mxu0 %v1896
        %v1996 = vpop.f32.mrf.mxu0
        %v1997 = vadd.f32 0.0, %v1996
        %1998 = vmatmul.f32.gmra.mxu0 %v1898
        %v1999 = vpop.f32.mrf.mxu0
        %v2000 = vadd.f32 0.0, %v1999
        %2001 = vmatmul.f32.gmra.mxu0 %v1900
        %v2002 = vpop.f32.mrf.mxu0
        %v2003 = vadd.f32 0.0, %v2002
        %2004 = vmatmul.f32.gmra.mxu0 %v1902
        %v2005 = vpop.f32.mrf.mxu0
        %v2006 = vadd.f32 0.0, %v2005
        %2007 = vmatmul.f32.gmra.mxu0 %v1904
        %v2008 = vpop.f32.mrf.mxu0
        %v2009 = vadd.f32 0.0, %v2008
        %2010 = vmatmul.f32.gmra.mxu0 %v1906
        %v2011 = vpop.f32.mrf.mxu0
        %v2012 = vadd.f32 0.0, %v2011
        %2013 = vmatmul.f32.gmra.mxu0 %v1908
        %v2014 = vpop.f32.mrf.mxu0
        %v2015 = vadd.f32 0.0, %v2014
        %2016 = vmatmul.f32.gmra.mxu0 %v1910
        %v2017 = vpop.f32.mrf.mxu0
        %v2018 = vadd.f32 0.0, %v2017
        %2019 = vmatmul.f32.gmra.mxu0 %v1912
        %v2020 = vpop.f32.mrf.mxu0
        %v2021 = vadd.f32 0.0, %v2020
        %2022 = vmatmul.f32.gmra.mxu0 %v1914
        %v2023 = vpop.f32.mrf.mxu0
        %v2024 = vadd.f32 0.0, %v2023
        %2025 = vmatmul.f32.gmra.mxu0 %v1916
        %v2026 = vpop.f32.mrf.mxu0
        %v2027 = vadd.f32 0.0, %v2026
        %2028 = vmatmul.f32.gmra.mxu0 %v1918
        %v2029 = vpop.f32.mrf.mxu0
        %v2030 = vadd.f32 0.0, %v2029
        %2031 = vmatmul.f32.gmra.mxu0 %v1920
        %v2032 = vpop.f32.mrf.mxu0
        %v2033 = vadd.f32 0.0, %v2032
        %2034 = vdwg.mxu0
        %v2035 = vmul.f32 %v492, %v1940
        %v2036 = vmul.f32 %v496, %v1943
        %v2037 = vmul.f32 %v500, %v1946
        %v2038 = vmul.f32 %v504, %v1949
        %v2039 = vmul.f32 %v508, %v1952
        %v2040 = vmul.f32 %v512, %v1955
        %v2041 = vmul.f32 %v516, %v1958
        %v2042 = vmul.f32 %v520, %v1961
        %v2043 = vmul.f32 %v524, %v1964
        %v2044 = vmul.f32 %v528, %v1967
        %v2045 = vmul.f32 %v532, %v1970
        %v2046 = vmul.f32 %v536, %v1973
        %v2047 = vmul.f32 %v540, %v1976
        %v2048 = vmul.f32 %v544, %v1979
        %v2049 = vmul.f32 %v548, %v1982
        %v2050 = vmul.f32 %v552, %v1985
        %v2051 = vmul.f32 %v556, %v1988
        %v2052 = vmul.f32 %v560, %v1991
        %v2053 = vmul.f32 %v564, %v1994
        %v2054 = vmul.f32 %v568, %v1997
        %v2055 = vmul.f32 %v572, %v2000
        %v2056 = vmul.f32 %v576, %v2003
        %v2057 = vmul.f32 %v580, %v2006
        %v2058 = vmul.f32 %v584, %v2009
        %v2059 = vmul.f32 %v588, %v2012
        %v2060 = vmul.f32 %v592, %v2015
        %v2061 = vmul.f32 %v596, %v2018
        %v2062 = vmul.f32 %v600, %v2021
        %v2063 = vmul.f32 %v604, %v2024
        %v2064 = vmul.f32 %v608, %v2027
        %v2065 = vmul.f32 %v612, %v2030
        %v2066 = vmul.f32 %v616, %v2033
        %v2067 = vadd.f32 %v2035, 0.0
        %v2068 = vadd.f32 %v2036, 0.0
        %v2069 = vadd.f32 %v2037, 0.0
        %v2070 = vadd.f32 %v2038, 0.0
        %v2071 = vadd.f32 %v2039, 0.0
        %v2072 = vadd.f32 %v2040, 0.0
        %v2073 = vadd.f32 %v2041, 0.0
        %v2074 = vadd.f32 %v2042, 0.0
        %v2075 = vadd.f32 %v2043, 0.0
        %v2076 = vadd.f32 %v2044, 0.0
        %v2077 = vadd.f32 %v2045, 0.0
        %v2078 = vadd.f32 %v2046, 0.0
        %v2079 = vadd.f32 %v2047, 0.0
        %v2080 = vadd.f32 %v2048, 0.0
        %v2081 = vadd.f32 %v2049, 0.0
        %v2082 = vadd.f32 %v2050, 0.0
        %v2083 = vadd.f32 %v2051, 0.0
        %v2084 = vadd.f32 %v2052, 0.0
        %v2085 = vadd.f32 %v2053, 0.0
        %v2086 = vadd.f32 %v2054, 0.0
        %v2087 = vadd.f32 %v2055, 0.0
        %v2088 = vadd.f32 %v2056, 0.0
        %v2089 = vadd.f32 %v2057, 0.0
        %v2090 = vadd.f32 %v2058, 0.0
        %v2091 = vadd.f32 %v2059, 0.0
        %v2092 = vadd.f32 %v2060, 0.0
        %v2093 = vadd.f32 %v2061, 0.0
        %v2094 = vadd.f32 %v2062, 0.0
        %v2095 = vadd.f32 %v2063, 0.0
        %v2096 = vadd.f32 %v2064, 0.0
        %v2097 = vadd.f32 %v2065, 0.0
        %v2098 = vadd.f32 %v2066, 0.0
        %s2099 = scalar_lea.vmem %s2, 64
        %v2100 = vld [vmem:[%s2099] sm:$0xff]
        %v2101 = vld [vmem:[%s2099 + $0x8] sm:$0xff]
        %v2102 = vld [vmem:[%s2099 + $0x10] sm:$0xff]
        %v2103 = vld [vmem:[%s2099 + $0x18] sm:$0xff]
        %v2104 = vld [vmem:[%s2099 + $0x20] sm:$0xff]
        %v2105 = vld [vmem:[%s2099 + $0x28] sm:$0xff]
        %v2106 = vld [vmem:[%s2099 + $0x30] sm:$0xff]
        %v2107 = vld [vmem:[%s2099 + $0x38] sm:$0xff]
        %2108 = vmatpush.msra.mxu0 0.0
        %2109 = vmatpush.msra.mxu0 0.0
        %2110 = vmatpush.msra.mxu0 0.0
        %2111 = vmatpush.msra.mxu0 0.0
        %2112 = vmatpush.msra.mxu0 0.0
        %2113 = vmatpush.msra.mxu0 0.0
        %2114 = vmatpush.msra.mxu0 0.0
        %2115 = vmatpush.msra.mxu0 0.0
        %2116 = vmatpush.msra.mxu0 %v2107
        %2117 = vmatpush.msra.mxu0 %v2106
        %2118 = vmatpush.msra.mxu0 %v2105
        %2119 = vmatpush.msra.mxu0 %v2104
        %2120 = vmatpush.msra.mxu0 %v2103
        %2121 = vmatpush.msra.mxu0 %v2102
        %2122 = vmatpush.msra.mxu0 %v2101
        %2123 = vmatpush.msra.mxu0 %v2100
        %2124 = vmatmul.f32.gmra.mxu0 %v1858
        %v2125 = vpop.f32.mrf.mxu0
        %v2126 = vadd.f32 0.0, %v2125
        %2127 = vmatmul.f32.gmra.mxu0 %v1860
        %v2128 = vpop.f32.mrf.mxu0
        %v2129 = vadd.f32 0.0, %v2128
        %2130 = vmatmul.f32.gmra.mxu0 %v1862
        %v2131 = vpop.f32.mrf.mxu0
        %v2132 = vadd.f32 0.0, %v2131
        %2133 = vmatmul.f32.gmra.mxu0 %v1864
        %v2134 = vpop.f32.mrf.mxu0
        %v2135 = vadd.f32 0.0, %v2134
        %2136 = vmatmul.f32.gmra.mxu0 %v1866
        %v2137 = vpop.f32.mrf.mxu0
        %v2138 = vadd.f32 0.0, %v2137
        %2139 = vmatmul.f32.gmra.mxu0 %v1868
        %v2140 = vpop.f32.mrf.mxu0
        %v2141 = vadd.f32 0.0, %v2140
        %2142 = vmatmul.f32.gmra.mxu0 %v1870
        %v2143 = vpop.f32.mrf.mxu0
        %v2144 = vadd.f32 0.0, %v2143
        %2145 = vmatmul.f32.gmra.mxu0 %v1872
        %v2146 = vpop.f32.mrf.mxu0
        %v2147 = vadd.f32 0.0, %v2146
        %2148 = vmatmul.f32.gmra.mxu0 %v1874
        %v2149 = vpop.f32.mrf.mxu0
        %v2150 = vadd.f32 0.0, %v2149
        %2151 = vmatmul.f32.gmra.mxu0 %v1876
        %v2152 = vpop.f32.mrf.mxu0
        %v2153 = vadd.f32 0.0, %v2152
        %2154 = vmatmul.f32.gmra.mxu0 %v1878
        %v2155 = vpop.f32.mrf.mxu0
        %v2156 = vadd.f32 0.0, %v2155
        %2157 = vmatmul.f32.gmra.mxu0 %v1880
        %v2158 = vpop.f32.mrf.mxu0
        %v2159 = vadd.f32 0.0, %v2158
        %2160 = vmatmul.f32.gmra.mxu0 %v1882
        %v2161 = vpop.f32.mrf.mxu0
        %v2162 = vadd.f32 0.0, %v2161
        %2163 = vmatmul.f32.gmra.mxu0 %v1884
        %v2164 = vpop.f32.mrf.mxu0
        %v2165 = vadd.f32 0.0, %v2164
        %2166 = vmatmul.f32.gmra.mxu0 %v1886
        %v2167 = vpop.f32.mrf.mxu0
        %v2168 = vadd.f32 0.0, %v2167
        %2169 = vmatmul.f32.gmra.mxu0 %v1888
        %v2170 = vpop.f32.mrf.mxu0
        %v2171 = vadd.f32 0.0, %v2170
        %2172 = vmatmul.f32.gmra.mxu0 %v1890
        %v2173 = vpop.f32.mrf.mxu0
        %v2174 = vadd.f32 0.0, %v2173
        %2175 = vmatmul.f32.gmra.mxu0 %v1892
        %v2176 = vpop.f32.mrf.mxu0
        %v2177 = vadd.f32 0.0, %v2176
        %2178 = vmatmul.f32.gmra.mxu0 %v1894
        %v2179 = vpop.f32.mrf.mxu0
        %v2180 = vadd.f32 0.0, %v2179
        %2181 = vmatmul.f32.gmra.mxu0 %v1896
        %v2182 = vpop.f32.mrf.mxu0
        %v2183 = vadd.f32 0.0, %v2182
        %2184 = vmatmul.f32.gmra.mxu0 %v1898
        %v2185 = vpop.f32.mrf.mxu0
        %v2186 = vadd.f32 0.0, %v2185
        %2187 = vmatmul.f32.gmra.mxu0 %v1900
        %v2188 = vpop.f32.mrf.mxu0
        %v2189 = vadd.f32 0.0, %v2188
        %2190 = vmatmul.f32.gmra.mxu0 %v1902
        %v2191 = vpop.f32.mrf.mxu0
        %v2192 = vadd.f32 0.0, %v2191
        %2193 = vmatmul.f32.gmra.mxu0 %v1904
        %v2194 = vpop.f32.mrf.mxu0
        %v2195 = vadd.f32 0.0, %v2194
        %2196 = vmatmul.f32.gmra.mxu0 %v1906
        %v2197 = vpop.f32.mrf.mxu0
        %v2198 = vadd.f32 0.0, %v2197
        %2199 = vmatmul.f32.gmra.mxu0 %v1908
        %v2200 = vpop.f32.mrf.mxu0
        %v2201 = vadd.f32 0.0, %v2200
        %2202 = vmatmul.f32.gmra.mxu0 %v1910
        %v2203 = vpop.f32.mrf.mxu0
        %v2204 = vadd.f32 0.0, %v2203
        %2205 = vmatmul.f32.gmra.mxu0 %v1912
        %v2206 = vpop.f32.mrf.mxu0
        %v2207 = vadd.f32 0.0, %v2206
        %2208 = vmatmul.f32.gmra.mxu0 %v1914
        %v2209 = vpop.f32.mrf.mxu0
        %v2210 = vadd.f32 0.0, %v2209
        %2211 = vmatmul.f32.gmra.mxu0 %v1916
        %v2212 = vpop.f32.mrf.mxu0
        %v2213 = vadd.f32 0.0, %v2212
        %2214 = vmatmul.f32.gmra.mxu0 %v1918
        %v2215 = vpop.f32.mrf.mxu0
        %v2216 = vadd.f32 0.0, %v2215
        %2217 = vmatmul.f32.gmra.mxu0 %v1920
        %v2218 = vpop.f32.mrf.mxu0
        %v2219 = vadd.f32 0.0, %v2218
        %2220 = vdwg.mxu0
        %v2221 = vmul.f32 %v802, %v2126
        %v2222 = vmul.f32 %v806, %v2129
        %v2223 = vmul.f32 %v810, %v2132
        %v2224 = vmul.f32 %v814, %v2135
        %v2225 = vmul.f32 %v818, %v2138
        %v2226 = vmul.f32 %v822, %v2141
        %v2227 = vmul.f32 %v826, %v2144
        %v2228 = vmul.f32 %v830, %v2147
        %v2229 = vmul.f32 %v834, %v2150
        %v2230 = vmul.f32 %v838, %v2153
        %v2231 = vmul.f32 %v842, %v2156
        %v2232 = vmul.f32 %v846, %v2159
        %v2233 = vmul.f32 %v850, %v2162
        %v2234 = vmul.f32 %v854, %v2165
        %v2235 = vmul.f32 %v858, %v2168
        %v2236 = vmul.f32 %v862, %v2171
        %v2237 = vmul.f32 %v866, %v2174
        %v2238 = vmul.f32 %v870, %v2177
        %v2239 = vmul.f32 %v874, %v2180
        %v2240 = vmul.f32 %v878, %v2183
        %v2241 = vmul.f32 %v882, %v2186
        %v2242 = vmul.f32 %v886, %v2189
        %v2243 = vmul.f32 %v890, %v2192
        %v2244 = vmul.f32 %v894, %v2195
        %v2245 = vmul.f32 %v898, %v2198
        %v2246 = vmul.f32 %v902, %v2201
        %v2247 = vmul.f32 %v906, %v2204
        %v2248 = vmul.f32 %v910, %v2207
        %v2249 = vmul.f32 %v914, %v2210
        %v2250 = vmul.f32 %v918, %v2213
        %v2251 = vmul.f32 %v922, %v2216
        %v2252 = vmul.f32 %v926, %v2219
        %v2253 = vadd.f32 %v2067, %v2221
        %v2254 = vadd.f32 %v2068, %v2222
        %v2255 = vadd.f32 %v2069, %v2223
        %v2256 = vadd.f32 %v2070, %v2224
        %v2257 = vadd.f32 %v2071, %v2225
        %v2258 = vadd.f32 %v2072, %v2226
        %v2259 = vadd.f32 %v2073, %v2227
        %v2260 = vadd.f32 %v2074, %v2228
        %v2261 = vadd.f32 %v2075, %v2229
        %v2262 = vadd.f32 %v2076, %v2230
        %v2263 = vadd.f32 %v2077, %v2231
        %v2264 = vadd.f32 %v2078, %v2232
        %v2265 = vadd.f32 %v2079, %v2233
        %v2266 = vadd.f32 %v2080, %v2234
        %v2267 = vadd.f32 %v2081, %v2235
        %v2268 = vadd.f32 %v2082, %v2236
        %v2269 = vadd.f32 %v2083, %v2237
        %v2270 = vadd.f32 %v2084, %v2238
        %v2271 = vadd.f32 %v2085, %v2239
        %v2272 = vadd.f32 %v2086, %v2240
        %v2273 = vadd.f32 %v2087, %v2241
        %v2274 = vadd.f32 %v2088, %v2242
        %v2275 = vadd.f32 %v2089, %v2243
        %v2276 = vadd.f32 %v2090, %v2244
        %v2277 = vadd.f32 %v2091, %v2245
        %v2278 = vadd.f32 %v2092, %v2246
        %v2279 = vadd.f32 %v2093, %v2247
        %v2280 = vadd.f32 %v2094, %v2248
        %v2281 = vadd.f32 %v2095, %v2249
        %v2282 = vadd.f32 %v2096, %v2250
        %v2283 = vadd.f32 %v2097, %v2251
        %v2284 = vadd.f32 %v2098, %v2252
        %s2285 = scalar_lea.vmem %s2, 128
        %v2286 = vld [vmem:[%s2285] sm:$0xff]
        %v2287 = vld [vmem:[%s2285 + $0x8] sm:$0xff]
        %v2288 = vld [vmem:[%s2285 + $0x10] sm:$0xff]
        %v2289 = vld [vmem:[%s2285 + $0x18] sm:$0xff]
        %v2290 = vld [vmem:[%s2285 + $0x20] sm:$0xff]
        %v2291 = vld [vmem:[%s2285 + $0x28] sm:$0xff]
        %v2292 = vld [vmem:[%s2285 + $0x30] sm:$0xff]
        %v2293 = vld [vmem:[%s2285 + $0x38] sm:$0xff]
        %2294 = vmatpush.msra.mxu0 0.0
        %2295 = vmatpush.msra.mxu0 0.0
        %2296 = vmatpush.msra.mxu0 0.0
        %2297 = vmatpush.msra.mxu0 0.0
        %2298 = vmatpush.msra.mxu0 0.0
        %2299 = vmatpush.msra.mxu0 0.0
        %2300 = vmatpush.msra.mxu0 0.0
        %2301 = vmatpush.msra.mxu0 0.0
        %2302 = vmatpush.msra.mxu0 %v2293
        %2303 = vmatpush.msra.mxu0 %v2292
        %2304 = vmatpush.msra.mxu0 %v2291
        %2305 = vmatpush.msra.mxu0 %v2290
        %2306 = vmatpush.msra.mxu0 %v2289
        %2307 = vmatpush.msra.mxu0 %v2288
        %2308 = vmatpush.msra.mxu0 %v2287
        %2309 = vmatpush.msra.mxu0 %v2286
        %2310 = vmatmul.f32.gmra.mxu0 %v1858
        %v2311 = vpop.f32.mrf.mxu0
        %v2312 = vadd.f32 0.0, %v2311
        %2313 = vmatmul.f32.gmra.mxu0 %v1860
        %v2314 = vpop.f32.mrf.mxu0
        %v2315 = vadd.f32 0.0, %v2314
        %2316 = vmatmul.f32.gmra.mxu0 %v1862
        %v2317 = vpop.f32.mrf.mxu0
        %v2318 = vadd.f32 0.0, %v2317
        %2319 = vmatmul.f32.gmra.mxu0 %v1864
        %v2320 = vpop.f32.mrf.mxu0
        %v2321 = vadd.f32 0.0, %v2320
        %2322 = vmatmul.f32.gmra.mxu0 %v1866
        %v2323 = vpop.f32.mrf.mxu0
        %v2324 = vadd.f32 0.0, %v2323
        %2325 = vmatmul.f32.gmra.mxu0 %v1868
        %v2326 = vpop.f32.mrf.mxu0
        %v2327 = vadd.f32 0.0, %v2326
        %2328 = vmatmul.f32.gmra.mxu0 %v1870
        %v2329 = vpop.f32.mrf.mxu0
        %v2330 = vadd.f32 0.0, %v2329
        %2331 = vmatmul.f32.gmra.mxu0 %v1872
        %v2332 = vpop.f32.mrf.mxu0
        %v2333 = vadd.f32 0.0, %v2332
        %2334 = vmatmul.f32.gmra.mxu0 %v1874
        %v2335 = vpop.f32.mrf.mxu0
        %v2336 = vadd.f32 0.0, %v2335
        %2337 = vmatmul.f32.gmra.mxu0 %v1876
        %v2338 = vpop.f32.mrf.mxu0
        %v2339 = vadd.f32 0.0, %v2338
        %2340 = vmatmul.f32.gmra.mxu0 %v1878
        %v2341 = vpop.f32.mrf.mxu0
        %v2342 = vadd.f32 0.0, %v2341
        %2343 = vmatmul.f32.gmra.mxu0 %v1880
        %v2344 = vpop.f32.mrf.mxu0
        %v2345 = vadd.f32 0.0, %v2344
        %2346 = vmatmul.f32.gmra.mxu0 %v1882
        %v2347 = vpop.f32.mrf.mxu0
        %v2348 = vadd.f32 0.0, %v2347
        %2349 = vmatmul.f32.gmra.mxu0 %v1884
        %v2350 = vpop.f32.mrf.mxu0
        %v2351 = vadd.f32 0.0, %v2350
        %2352 = vmatmul.f32.gmra.mxu0 %v1886
        %v2353 = vpop.f32.mrf.mxu0
        %v2354 = vadd.f32 0.0, %v2353
        %2355 = vmatmul.f32.gmra.mxu0 %v1888
        %v2356 = vpop.f32.mrf.mxu0
        %v2357 = vadd.f32 0.0, %v2356
        %2358 = vmatmul.f32.gmra.mxu0 %v1890
        %v2359 = vpop.f32.mrf.mxu0
        %v2360 = vadd.f32 0.0, %v2359
        %2361 = vmatmul.f32.gmra.mxu0 %v1892
        %v2362 = vpop.f32.mrf.mxu0
        %v2363 = vadd.f32 0.0, %v2362
        %2364 = vmatmul.f32.gmra.mxu0 %v1894
        %v2365 = vpop.f32.mrf.mxu0
        %v2366 = vadd.f32 0.0, %v2365
        %2367 = vmatmul.f32.gmra.mxu0 %v1896
        %v2368 = vpop.f32.mrf.mxu0
        %v2369 = vadd.f32 0.0, %v2368
        %2370 = vmatmul.f32.gmra.mxu0 %v1898
        %v2371 = vpop.f32.mrf.mxu0
        %v2372 = vadd.f32 0.0, %v2371
        %2373 = vmatmul.f32.gmra.mxu0 %v1900
        %v2374 = vpop.f32.mrf.mxu0
        %v2375 = vadd.f32 0.0, %v2374
        %2376 = vmatmul.f32.gmra.mxu0 %v1902
        %v2377 = vpop.f32.mrf.mxu0
        %v2378 = vadd.f32 0.0, %v2377
        %2379 = vmatmul.f32.gmra.mxu0 %v1904
        %v2380 = vpop.f32.mrf.mxu0
        %v2381 = vadd.f32 0.0, %v2380
        %2382 = vmatmul.f32.gmra.mxu0 %v1906
        %v2383 = vpop.f32.mrf.mxu0
        %v2384 = vadd.f32 0.0, %v2383
        %2385 = vmatmul.f32.gmra.mxu0 %v1908
        %v2386 = vpop.f32.mrf.mxu0
        %v2387 = vadd.f32 0.0, %v2386
        %2388 = vmatmul.f32.gmra.mxu0 %v1910
        %v2389 = vpop.f32.mrf.mxu0
        %v2390 = vadd.f32 0.0, %v2389
        %2391 = vmatmul.f32.gmra.mxu0 %v1912
        %v2392 = vpop.f32.mrf.mxu0
        %v2393 = vadd.f32 0.0, %v2392
        %2394 = vmatmul.f32.gmra.mxu0 %v1914
        %v2395 = vpop.f32.mrf.mxu0
        %v2396 = vadd.f32 0.0, %v2395
        %2397 = vmatmul.f32.gmra.mxu0 %v1916
        %v2398 = vpop.f32.mrf.mxu0
        %v2399 = vadd.f32 0.0, %v2398
        %2400 = vmatmul.f32.gmra.mxu0 %v1918
        %v2401 = vpop.f32.mrf.mxu0
        %v2402 = vadd.f32 0.0, %v2401
        %2403 = vmatmul.f32.gmra.mxu0 %v1920
        %v2404 = vpop.f32.mrf.mxu0
        %v2405 = vadd.f32 0.0, %v2404
        %2406 = vdwg.mxu0
        %v2407 = vmul.f32 %v1112, %v2312
        %v2408 = vmul.f32 %v1116, %v2315
        %v2409 = vmul.f32 %v1120, %v2318
        %v2410 = vmul.f32 %v1124, %v2321
        %v2411 = vmul.f32 %v1128, %v2324
        %v2412 = vmul.f32 %v1132, %v2327
        %v2413 = vmul.f32 %v1136, %v2330
        %v2414 = vmul.f32 %v1140, %v2333
        %v2415 = vmul.f32 %v1144, %v2336
        %v2416 = vmul.f32 %v1148, %v2339
        %v2417 = vmul.f32 %v1152, %v2342
        %v2418 = vmul.f32 %v1156, %v2345
        %v2419 = vmul.f32 %v1160, %v2348
        %v2420 = vmul.f32 %v1164, %v2351
        %v2421 = vmul.f32 %v1168, %v2354
        %v2422 = vmul.f32 %v1172, %v2357
        %v2423 = vmul.f32 %v1176, %v2360
        %v2424 = vmul.f32 %v1180, %v2363
        %v2425 = vmul.f32 %v1184, %v2366
        %v2426 = vmul.f32 %v1188, %v2369
        %v2427 = vmul.f32 %v1192, %v2372
        %v2428 = vmul.f32 %v1196, %v2375
        %v2429 = vmul.f32 %v1200, %v2378
        %v2430 = vmul.f32 %v1204, %v2381
        %v2431 = vmul.f32 %v1208, %v2384
        %v2432 = vmul.f32 %v1212, %v2387
        %v2433 = vmul.f32 %v1216, %v2390
        %v2434 = vmul.f32 %v1220, %v2393
        %v2435 = vmul.f32 %v1224, %v2396
        %v2436 = vmul.f32 %v1228, %v2399
        %v2437 = vmul.f32 %v1232, %v2402
        %v2438 = vmul.f32 %v1236, %v2405
        %v2439 = vadd.f32 %v2253, %v2407
        %v2440 = vadd.f32 %v2254, %v2408
        %v2441 = vadd.f32 %v2255, %v2409
        %v2442 = vadd.f32 %v2256, %v2410
        %v2443 = vadd.f32 %v2257, %v2411
        %v2444 = vadd.f32 %v2258, %v2412
        %v2445 = vadd.f32 %v2259, %v2413
        %v2446 = vadd.f32 %v2260, %v2414
        %v2447 = vadd.f32 %v2261, %v2415
        %v2448 = vadd.f32 %v2262, %v2416
        %v2449 = vadd.f32 %v2263, %v2417
        %v2450 = vadd.f32 %v2264, %v2418
        %v2451 = vadd.f32 %v2265, %v2419
        %v2452 = vadd.f32 %v2266, %v2420
        %v2453 = vadd.f32 %v2267, %v2421
        %v2454 = vadd.f32 %v2268, %v2422
        %v2455 = vadd.f32 %v2269, %v2423
        %v2456 = vadd.f32 %v2270, %v2424
        %v2457 = vadd.f32 %v2271, %v2425
        %v2458 = vadd.f32 %v2272, %v2426
        %v2459 = vadd.f32 %v2273, %v2427
        %v2460 = vadd.f32 %v2274, %v2428
        %v2461 = vadd.f32 %v2275, %v2429
        %v2462 = vadd.f32 %v2276, %v2430
        %v2463 = vadd.f32 %v2277, %v2431
        %v2464 = vadd.f32 %v2278, %v2432
        %v2465 = vadd.f32 %v2279, %v2433
        %v2466 = vadd.f32 %v2280, %v2434
        %v2467 = vadd.f32 %v2281, %v2435
        %v2468 = vadd.f32 %v2282, %v2436
        %v2469 = vadd.f32 %v2283, %v2437
        %v2470 = vadd.f32 %v2284, %v2438
        %s2471 = scalar_lea.vmem %s2, 192
        %v2472 = vld [vmem:[%s2471] sm:$0xff]
        %v2473 = vld [vmem:[%s2471 + $0x8] sm:$0xff]
        %v2474 = vld [vmem:[%s2471 + $0x10] sm:$0xff]
        %v2475 = vld [vmem:[%s2471 + $0x18] sm:$0xff]
        %v2476 = vld [vmem:[%s2471 + $0x20] sm:$0xff]
        %v2477 = vld [vmem:[%s2471 + $0x28] sm:$0xff]
        %v2478 = vld [vmem:[%s2471 + $0x30] sm:$0xff]
        %v2479 = vld [vmem:[%s2471 + $0x38] sm:$0xff]
        %2480 = vmatpush.msra.mxu0 0.0
        %2481 = vmatpush.msra.mxu0 0.0
        %2482 = vmatpush.msra.mxu0 0.0
        %2483 = vmatpush.msra.mxu0 0.0
        %2484 = vmatpush.msra.mxu0 0.0
        %2485 = vmatpush.msra.mxu0 0.0
        %2486 = vmatpush.msra.mxu0 0.0
        %2487 = vmatpush.msra.mxu0 0.0
        %2488 = vmatpush.msra.mxu0 %v2479
        %2489 = vmatpush.msra.mxu0 %v2478
        %2490 = vmatpush.msra.mxu0 %v2477
        %2491 = vmatpush.msra.mxu0 %v2476
        %2492 = vmatpush.msra.mxu0 %v2475
        %2493 = vmatpush.msra.mxu0 %v2474
        %2494 = vmatpush.msra.mxu0 %v2473
        %2495 = vmatpush.msra.mxu0 %v2472
        %2496 = vmatmul.f32.gmra.mxu0 %v1858
        %v2497 = vpop.f32.mrf.mxu0
        %v2498 = vadd.f32 0.0, %v2497
        %2499 = vmatmul.f32.gmra.mxu0 %v1860
        %v2500 = vpop.f32.mrf.mxu0
        %v2501 = vadd.f32 0.0, %v2500
        %2502 = vmatmul.f32.gmra.mxu0 %v1862
        %v2503 = vpop.f32.mrf.mxu0
        %v2504 = vadd.f32 0.0, %v2503
        %2505 = vmatmul.f32.gmra.mxu0 %v1864
        %v2506 = vpop.f32.mrf.mxu0
        %v2507 = vadd.f32 0.0, %v2506
        %2508 = vmatmul.f32.gmra.mxu0 %v1866
        %v2509 = vpop.f32.mrf.mxu0
        %v2510 = vadd.f32 0.0, %v2509
        %2511 = vmatmul.f32.gmra.mxu0 %v1868
        %v2512 = vpop.f32.mrf.mxu0
        %v2513 = vadd.f32 0.0, %v2512
        %2514 = vmatmul.f32.gmra.mxu0 %v1870
        %v2515 = vpop.f32.mrf.mxu0
        %v2516 = vadd.f32 0.0, %v2515
        %2517 = vmatmul.f32.gmra.mxu0 %v1872
        %v2518 = vpop.f32.mrf.mxu0
        %v2519 = vadd.f32 0.0, %v2518
        %2520 = vmatmul.f32.gmra.mxu0 %v1874
        %v2521 = vpop.f32.mrf.mxu0
        %v2522 = vadd.f32 0.0, %v2521
        %2523 = vmatmul.f32.gmra.mxu0 %v1876
        %v2524 = vpop.f32.mrf.mxu0
        %v2525 = vadd.f32 0.0, %v2524
        %2526 = vmatmul.f32.gmra.mxu0 %v1878
        %v2527 = vpop.f32.mrf.mxu0
        %v2528 = vadd.f32 0.0, %v2527
        %2529 = vmatmul.f32.gmra.mxu0 %v1880
        %v2530 = vpop.f32.mrf.mxu0
        %v2531 = vadd.f32 0.0, %v2530
        %2532 = vmatmul.f32.gmra.mxu0 %v1882
        %v2533 = vpop.f32.mrf.mxu0
        %v2534 = vadd.f32 0.0, %v2533
        %2535 = vmatmul.f32.gmra.mxu0 %v1884
        %v2536 = vpop.f32.mrf.mxu0
        %v2537 = vadd.f32 0.0, %v2536
        %2538 = vmatmul.f32.gmra.mxu0 %v1886
        %v2539 = vpop.f32.mrf.mxu0
        %v2540 = vadd.f32 0.0, %v2539
        %2541 = vmatmul.f32.gmra.mxu0 %v1888
        %v2542 = vpop.f32.mrf.mxu0
        %v2543 = vadd.f32 0.0, %v2542
        %2544 = vmatmul.f32.gmra.mxu0 %v1890
        %v2545 = vpop.f32.mrf.mxu0
        %v2546 = vadd.f32 0.0, %v2545
        %2547 = vmatmul.f32.gmra.mxu0 %v1892
        %v2548 = vpop.f32.mrf.mxu0
        %v2549 = vadd.f32 0.0, %v2548
        %2550 = vmatmul.f32.gmra.mxu0 %v1894
        %v2551 = vpop.f32.mrf.mxu0
        %v2552 = vadd.f32 0.0, %v2551
        %2553 = vmatmul.f32.gmra.mxu0 %v1896
        %v2554 = vpop.f32.mrf.mxu0
        %v2555 = vadd.f32 0.0, %v2554
        %2556 = vmatmul.f32.gmra.mxu0 %v1898
        %v2557 = vpop.f32.mrf.mxu0
        %v2558 = vadd.f32 0.0, %v2557
        %2559 = vmatmul.f32.gmra.mxu0 %v1900
        %v2560 = vpop.f32.mrf.mxu0
        %v2561 = vadd.f32 0.0, %v2560
        %2562 = vmatmul.f32.gmra.mxu0 %v1902
        %v2563 = vpop.f32.mrf.mxu0
        %v2564 = vadd.f32 0.0, %v2563
        %2565 = vmatmul.f32.gmra.mxu0 %v1904
        %v2566 = vpop.f32.mrf.mxu0
        %v2567 = vadd.f32 0.0, %v2566
        %2568 = vmatmul.f32.gmra.mxu0 %v1906
        %v2569 = vpop.f32.mrf.mxu0
        %v2570 = vadd.f32 0.0, %v2569
        %2571 = vmatmul.f32.gmra.mxu0 %v1908
        %v2572 = vpop.f32.mrf.mxu0
        %v2573 = vadd.f32 0.0, %v2572
        %2574 = vmatmul.f32.gmra.mxu0 %v1910
        %v2575 = vpop.f32.mrf.mxu0
        %v2576 = vadd.f32 0.0, %v2575
        %2577 = vmatmul.f32.gmra.mxu0 %v1912
        %v2578 = vpop.f32.mrf.mxu0
        %v2579 = vadd.f32 0.0, %v2578
        %2580 = vmatmul.f32.gmra.mxu0 %v1914
        %v2581 = vpop.f32.mrf.mxu0
        %v2582 = vadd.f32 0.0, %v2581
        %2583 = vmatmul.f32.gmra.mxu0 %v1916
        %v2584 = vpop.f32.mrf.mxu0
        %v2585 = vadd.f32 0.0, %v2584
        %2586 = vmatmul.f32.gmra.mxu0 %v1918
        %v2587 = vpop.f32.mrf.mxu0
        %v2588 = vadd.f32 0.0, %v2587
        %2589 = vmatmul.f32.gmra.mxu0 %v1920
        %v2590 = vpop.f32.mrf.mxu0
        %v2591 = vadd.f32 0.0, %v2590
        %2592 = vdwg.mxu0
        %v2593 = vmul.f32 %v1422, %v2498
        %v2594 = vmul.f32 %v1426, %v2501
        %v2595 = vmul.f32 %v1430, %v2504
        %v2596 = vmul.f32 %v1434, %v2507
        %v2597 = vmul.f32 %v1438, %v2510
        %v2598 = vmul.f32 %v1442, %v2513
        %v2599 = vmul.f32 %v1446, %v2516
        %v2600 = vmul.f32 %v1450, %v2519
        %v2601 = vmul.f32 %v1454, %v2522
        %v2602 = vmul.f32 %v1458, %v2525
        %v2603 = vmul.f32 %v1462, %v2528
        %v2604 = vmul.f32 %v1466, %v2531
        %v2605 = vmul.f32 %v1470, %v2534
        %v2606 = vmul.f32 %v1474, %v2537
        %v2607 = vmul.f32 %v1478, %v2540
        %v2608 = vmul.f32 %v1482, %v2543
        %v2609 = vmul.f32 %v1486, %v2546
        %v2610 = vmul.f32 %v1490, %v2549
        %v2611 = vmul.f32 %v1494, %v2552
        %v2612 = vmul.f32 %v1498, %v2555
        %v2613 = vmul.f32 %v1502, %v2558
        %v2614 = vmul.f32 %v1506, %v2561
        %v2615 = vmul.f32 %v1510, %v2564
        %v2616 = vmul.f32 %v1514, %v2567
        %v2617 = vmul.f32 %v1518, %v2570
        %v2618 = vmul.f32 %v1522, %v2573
        %v2619 = vmul.f32 %v1526, %v2576
        %v2620 = vmul.f32 %v1530, %v2579
        %v2621 = vmul.f32 %v1534, %v2582
        %v2622 = vmul.f32 %v1538, %v2585
        %v2623 = vmul.f32 %v1542, %v2588
        %v2624 = vmul.f32 %v1546, %v2591
        %v2625 = vadd.f32 %v2439, %v2593
        %v2626 = vadd.f32 %v2440, %v2594
        %v2627 = vadd.f32 %v2441, %v2595
        %v2628 = vadd.f32 %v2442, %v2596
        %v2629 = vadd.f32 %v2443, %v2597
        %v2630 = vadd.f32 %v2444, %v2598
        %v2631 = vadd.f32 %v2445, %v2599
        %v2632 = vadd.f32 %v2446, %v2600
        %v2633 = vadd.f32 %v2447, %v2601
        %v2634 = vadd.f32 %v2448, %v2602
        %v2635 = vadd.f32 %v2449, %v2603
        %v2636 = vadd.f32 %v2450, %v2604
        %v2637 = vadd.f32 %v2451, %v2605
        %v2638 = vadd.f32 %v2452, %v2606
        %v2639 = vadd.f32 %v2453, %v2607
        %v2640 = vadd.f32 %v2454, %v2608
        %v2641 = vadd.f32 %v2455, %v2609
        %v2642 = vadd.f32 %v2456, %v2610
        %v2643 = vadd.f32 %v2457, %v2611
        %v2644 = vadd.f32 %v2458, %v2612
        %v2645 = vadd.f32 %v2459, %v2613
        %v2646 = vadd.f32 %v2460, %v2614
        %v2647 = vadd.f32 %v2461, %v2615
        %v2648 = vadd.f32 %v2462, %v2616
        %v2649 = vadd.f32 %v2463, %v2617
        %v2650 = vadd.f32 %v2464, %v2618
        %v2651 = vadd.f32 %v2465, %v2619
        %v2652 = vadd.f32 %v2466, %v2620
        %v2653 = vadd.f32 %v2467, %v2621
        %v2654 = vadd.f32 %v2468, %v2622
        %v2655 = vadd.f32 %v2469, %v2623
        %v2656 = vadd.f32 %v2470, %v2624
        %v2658 = vperm.slane %v1849, 0
        %v2660 = vadd.f32 %v2625, %v2658
        %v2661 = vadd.f32 %v2626, %v2658
        %v2662 = vadd.f32 %v2627, %v2658
        %v2663 = vadd.f32 %v2628, %v2658
        %v2664 = vadd.f32 %v2629, %v2658
        %v2665 = vadd.f32 %v2630, %v2658
        %v2666 = vadd.f32 %v2631, %v2658
        %v2667 = vadd.f32 %v2632, %v2658
        %v2668 = vadd.f32 %v2633, %v2658
        %v2669 = vadd.f32 %v2634, %v2658
        %v2670 = vadd.f32 %v2635, %v2658
        %v2671 = vadd.f32 %v2636, %v2658
        %v2672 = vadd.f32 %v2637, %v2658
        %v2673 = vadd.f32 %v2638, %v2658
        %v2674 = vadd.f32 %v2639, %v2658
        %v2675 = vadd.f32 %v2640, %v2658
        %v2676 = vadd.f32 %v2641, %v2658
        %v2677 = vadd.f32 %v2642, %v2658
        %v2678 = vadd.f32 %v2643, %v2658
        %v2679 = vadd.f32 %v2644, %v2658
        %v2680 = vadd.f32 %v2645, %v2658
        %v2681 = vadd.f32 %v2646, %v2658
        %v2682 = vadd.f32 %v2647, %v2658
        %v2683 = vadd.f32 %v2648, %v2658
        %v2684 = vadd.f32 %v2649, %v2658
        %v2685 = vadd.f32 %v2650, %v2658
        %v2686 = vadd.f32 %v2651, %v2658
        %v2687 = vadd.f32 %v2652, %v2658
        %v2688 = vadd.f32 %v2653, %v2658
        %v2689 = vadd.f32 %v2654, %v2658
        %v2690 = vadd.f32 %v2655, %v2658
        %v2691 = vadd.f32 %v2656, %v2658
        %v2692 = vmax.f32 %v2660, 0.0
        %v2693 = vmax.f32 %v2661, 0.0
        %v2694 = vmax.f32 %v2662, 0.0
        %v2695 = vmax.f32 %v2663, 0.0
        %v2696 = vmax.f32 %v2664, 0.0
        %v2697 = vmax.f32 %v2665, 0.0
        %v2698 = vmax.f32 %v2666, 0.0
        %v2699 = vmax.f32 %v2667, 0.0
        %v2700 = vmax.f32 %v2668, 0.0
        %v2701 = vmax.f32 %v2669, 0.0
        %v2702 = vmax.f32 %v2670, 0.0
        %v2703 = vmax.f32 %v2671, 0.0
        %v2704 = vmax.f32 %v2672, 0.0
        %v2705 = vmax.f32 %v2673, 0.0
        %v2706 = vmax.f32 %v2674, 0.0
        %v2707 = vmax.f32 %v2675, 0.0
        %v2708 = vmax.f32 %v2676, 0.0
        %v2709 = vmax.f32 %v2677, 0.0
        %v2710 = vmax.f32 %v2678, 0.0
        %v2711 = vmax.f32 %v2679, 0.0
        %v2712 = vmax.f32 %v2680, 0.0
        %v2713 = vmax.f32 %v2681, 0.0
        %v2714 = vmax.f32 %v2682, 0.0
        %v2715 = vmax.f32 %v2683, 0.0
        %v2716 = vmax.f32 %v2684, 0.0
        %v2717 = vmax.f32 %v2685, 0.0
        %v2718 = vmax.f32 %v2686, 0.0
        %v2719 = vmax.f32 %v2687, 0.0
        %v2720 = vmax.f32 %v2688, 0.0
        %v2721 = vmax.f32 %v2689, 0.0
        %v2722 = vmax.f32 %v2690, 0.0
        %v2723 = vmax.f32 %v2691, 0.0
        %2724 = vmatpush.msra.mxu0 %v2707
        %2725 = vmatpush.msra.mxu0 %v2706
        %2726 = vmatpush.msra.mxu0 %v2705
        %2727 = vmatpush.msra.mxu0 %v2704
        %2728 = vmatpush.msra.mxu0 %v2703
        %2729 = vmatpush.msra.mxu0 %v2702
        %2730 = vmatpush.msra.mxu0 %v2701
        %2731 = vmatpush.msra.mxu0 %v2700
        %2732 = vmatpush.msra.mxu0 %v2699
        %2733 = vmatpush.msra.mxu0 %v2698
        %2734 = vmatpush.msra.mxu0 %v2697
        %2735 = vmatpush.msra.mxu0 %v2696
        %2736 = vmatpush.msra.mxu0 %v2695
        %2737 = vmatpush.msra.mxu0 %v2694
        %2738 = vmatpush.msra.mxu0 %v2693
        %2739 = vmatpush.msra.mxu0 %v2692
        %2740 = vmatmul.f32.gmra.mxu0 %v272
        %v2741 = vpop.f32.mrf.mxu0
        %v2742 = vadd.f32 0.0, %v2741
        %2743 = vdwg.mxu0
        %2744 = vmatpush.msra.mxu0 %v2723
        %2745 = vmatpush.msra.mxu0 %v2722
        %2746 = vmatpush.msra.mxu0 %v2721
        %2747 = vmatpush.msra.mxu0 %v2720
        %2748 = vmatpush.msra.mxu0 %v2719
        %2749 = vmatpush.msra.mxu0 %v2718
        %2750 = vmatpush.msra.mxu0 %v2717
        %2751 = vmatpush.msra.mxu0 %v2716
        %2752 = vmatpush.msra.mxu0 %v2715
        %2753 = vmatpush.msra.mxu0 %v2714
        %2754 = vmatpush.msra.mxu0 %v2713
        %2755 = vmatpush.msra.mxu0 %v2712
        %2756 = vmatpush.msra.mxu0 %v2711
        %2757 = vmatpush.msra.mxu0 %v2710
        %2758 = vmatpush.msra.mxu0 %v2709
        %2759 = vmatpush.msra.mxu0 %v2708
        %2760 = vmatmul.f32.gmra.mxu0 %v273
        %v2761 = vpop.f32.mrf.mxu0
        %v2762 = vadd.f32 %v2742, %v2761
        %2763 = vdwg.mxu0
        %2765 = vrot.lane.b32.xlu0 %v2762, 64
        %v2766 = vpop.permute.xlu0 %2765
        %vm2768 = vcmask 1048064
        %2769 = vst.msk [vmem:[%s218] sm:$0xff] %vm2768, %v2766
        %2770 = vst.msk [vmem:[%s218 + $0x8] sm:$0xff] %vm1847, %v2766
        %s2771 = sand.u32 %s137, 1
        %s2772 = scalar_lea.sflag [#allocation3], %s2771
        %s2773 = sand.u32 %s137, 1
        %s2774 = smul.addr %s2773, 16
        %s2775 = scalar_lea.vmem [#allocation2], %s2774
        // Predicated region
        $region41: #{tpu_custom_call.1} parent=39 // pred_check
          %p2776 = pneg %p147
        $region42: #{tpu_custom_call.1} parent=39 // pred_check_branch
          %2778 = sbr.rel (%p2776) target = $region44
        $region43: #{tpu_custom_call.1} parent=39 // pred_region
          %2780 = vsyncadd %s2772, 0
          %s2781 = smul.addr %s19, 2
          %s2782 = smul.addr %s2781, 8
          %s2783 = scalar_lea.hbm %s5, %s2782
          %s2785 = sshll.u32 %s2775, 4
          %s2786 = int_to_ptr.vmem [resolvable:$true] %s2785
          %s2787 = sshll.u32 %s2783, 4
          %s2788 = int_to_ptr.hbm [resolvable:$true] %s2787
          %2790 = dma.vmem_to_hbm [thread:$0]  %s2786, 256, %s2788, %s2772
        $region44: #{tpu_custom_call.1} parent=39 // pred_fallthru
          _
      $region40: #{tpu_custom_call.1} parent=5 // pred_fallthru
        _
      %p2791 = scmp.le.s32.totalorder 2, %s14
      // Predicated region
      $region45: #{tpu_custom_call.1} parent=5 // pred_check
        %p2792 = pneg %p2791
      $region46: #{tpu_custom_call.1} parent=5 // pred_check_branch
        %2794 = sbr.rel (%p2792) target = $region48
      $region47: #{tpu_custom_call.1} parent=5 // pred_region
        %s2795 = ssub.s32 %s14, 2
        // Predicated region
        $region49: #{tpu_custom_call.1} parent=47 // pred_check
          %p2796 = pneg %p153
        $region50: #{tpu_custom_call.1} parent=47 // pred_check_branch
          %2798 = sbr.rel (%p2796) target = $region52
        $region51: #{tpu_custom_call.1} parent=47 // pred_region
          %s2799 = sand.u32 %s138, 1
          %s2800 = scalar_lea.sflag [#allocation3], %s2799
          %s2801 = sand.u32 %s138, 1
          %s2802 = smul.addr %s2801, 16
          %s2803 = scalar_lea.vmem [#allocation2], %s2802
          %2805 = dma.done %s2800, 256
        $region52: #{tpu_custom_call.1} parent=47 // pred_fallthru
          _
      $region48: #{tpu_custom_call.1} parent=5 // pred_fallthru
        _
    $region6: #{tpu_custom_call.1} parent=1 // loop_footer
      %s18 = sadd.s32 1, %s14
    $region7: #{tpu_custom_call.1} parent=1 // loop_footer_branch
      %13 = sbr.rel target = $region3
    $region8: #{tpu_custom_call.1} parent=1 // loop_exit
      _
    %2806 = vsyncpa [#allocation3], 1
    %s2807 = scalar_lea.sflag [#allocation3], 1
    %2808 = vsyncpa %s2807, 1

</llo_original>
